<compile_context>
chip_gen: v6e
topology: v6e:2x2x1
jax: 0.10.0
libtpu: 0.0.40
codegen_flags: <defaults>
</compile_context>

<pallas_src>
import functools

import jax
import jax.numpy as jnp
from jax.experimental import pallas as pl
from jax.experimental.pallas import tpu as pltpu


def _attention_kernel(xq_ref, xkv_ref, wqg_ref, wkv_ref, bg_ref, wo_ref,
                      bo_ref, gamma_ref, beta_ref, o_ref, k_cache, v_cache,
                      *, heads, dim_head, eps):
    inner = heads * dim_head
    qi = pl.program_id(1)

    # ---- K/V projection for the whole sequence, computed once per batch row and ----
    # ---- cached in VMEM across q-tiles (q-tile grid axis is sequential).         ----
    @pl.when(qi == 0)
    def _():
        x_kv = xkv_ref[0]                                     # (N, D) bf16
        kv = jnp.dot(x_kv, wkv_ref[...],
                     preferred_element_type=jnp.float32)      # (N, 2*inner) f32
        kv = kv.astype(jnp.bfloat16)
        for h in range(heads):
            lo = h * dim_head
            k_cache[h] = kv[:, lo:lo + dim_head]
            v_cache[h] = kv[:, inner + lo:inner + lo + dim_head]

    x_rows = xq_ref[0]                                        # (TQ, D) f32 (residual/LN)
    xq = x_rows.astype(jnp.bfloat16)

    # Fused Q|gate projection (dim_head**-0.5 already folded into Wq host-side).
    qg = jnp.dot(xq, wqg_ref[...], preferred_element_type=jnp.float32)   # (TQ, 2*inner)
    gates = jax.nn.sigmoid(qg[:, inner:] + bg_ref[...])      # (TQ, inner) f32

    # Per-head attention (short unrolled loop): dots -> softmax (deferred norm) -> PV.
    out_parts = []
    for h in range(heads):
        lo = h * dim_head
        q_h = qg[:, lo:lo + dim_head].astype(jnp.bfloat16)    # (TQ, dh)
        # dots = q_h @ k_h^T with the transpose folded into the contraction
        dots = jax.lax.dot_general(
            q_h, k_cache[h],
            dimension_numbers=(((1,), (1,)), ((), ())),
            preferred_element_type=jnp.float32)               # (TQ, N)
        m = jnp.max(dots, axis=-1, keepdims=True)
        p = jnp.exp(dots - m)
        denom = jnp.sum(p, axis=-1, keepdims=True)            # (TQ, 1)
        pv = jnp.dot(p.astype(jnp.bfloat16), v_cache[h],
                     preferred_element_type=jnp.float32)      # (TQ, dh)
        # deferred softmax normalization: scale the (TQ, dh) result, not the (TQ, N) probs
        out_parts.append(pv * pl.reciprocal(denom, approx=True))

    out = jnp.concatenate(out_parts, axis=-1) * gates         # (TQ, inner) f32

    # Single full-contraction output projection: (TQ, inner) x (inner, D).
    proj = jnp.dot(out.astype(jnp.bfloat16), wo_ref[...],
                   preferred_element_type=jnp.float32)        # (TQ, D)

    # residual + LayerNorm in f32
    res = x_rows.astype(jnp.float32) + proj + bo_ref[...]
    mean = jnp.mean(res, axis=-1, keepdims=True)
    c = res - mean
    var = jnp.mean(c * c, axis=-1, keepdims=True)
    normed = c * jax.lax.rsqrt(var + eps)
    o_ref[0] = (normed * gamma_ref[...] + beta_ref[...]).astype(o_ref.dtype)


def _pick_q_tile(n, cap):
    """Largest multiple of 8 that divides n and is <= cap; falls back to n (untiled)."""
    if n <= cap:
        return n
    t = (cap // 8) * 8
    while t >= 8:
        if n % t == 0:
            return t
        t -= 8
    return n


def attention_forward(x, params, *, heads, dim_head, eps=1e-5, q_tile=None):
    B, N, D = x.shape
    inner = heads * dim_head
    wq, wkv, wg, bg, wo, bo, gamma, beta = params
    scale = dim_head ** (-0.5)

    # ---- host-side weight fusion / re-layout (free relative to the kernel) ----
    w_qg = jnp.concatenate([wq * scale, wg], axis=1).astype(jnp.bfloat16)  # (D, 2*inner)
    w_kv = wkv.astype(jnp.bfloat16)                                        # (D, 2*inner) = [Wk|Wv]
    wo_b = wo.astype(jnp.bfloat16)                                         # (inner, D)
    bg_f = bg.reshape(1, inner).astype(jnp.float32)
    bo_f = bo.reshape(1, D).astype(jnp.float32)
    gamma_f = gamma.reshape(1, D).astype(jnp.float32)
    beta_f = beta.reshape(1, D).astype(jnp.float32)

    # pre-cast bf16 copy of x used only as the K/V MXU operand (halves that DMA)
    x_kv = x.astype(jnp.bfloat16)

    # ---- q tiling over the sequence ----
    cap = 128 if N >= 2048 else 256        # smaller score blocks for big N (v7x 64 MiB VMEM)
    if q_tile is None or N % q_tile != 0 or (q_tile != N and q_tile % 8 != 0):
        q_tile = _pick_q_tile(N, cap)
    n_qt = N // q_tile
    # TODO(synk): for very large N also tile the kv axis with online-softmax accumulation
    # (flash pattern) so the (q_tile, N) score block and the (heads, N, dh) K/V cache stay bounded.

    kernel = functools.partial(_attention_kernel, heads=heads, dim_head=dim_head, eps=eps)

    idx_q = lambda b, qi: (b, qi, 0)      # q-tile rows of x (and the output)
    idx_kv = lambda b, qi: (b, 0, 0)      # full sequence rows (DMA'd once per b)
    idx_w = lambda b, qi: (0, 0)          # weights: resident, never re-fetched

    return pl.pallas_call(
        kernel,
        out_shape=jax.ShapeDtypeStruct((B, N, D), x.dtype),
        grid_spec=pltpu.PrefetchScalarGridSpec(
            num_scalar_prefetch=0,
            grid=(B, n_qt),
            in_specs=[
                pl.BlockSpec((1, q_tile, D), idx_q),     # x (f32, q-tile rows)
                pl.BlockSpec((1, N, D), idx_kv),         # x (bf16, full seq, for K/V)
                pl.BlockSpec((D, 2 * inner), idx_w),     # [Wq*scale | Wg]  bf16
                pl.BlockSpec((D, 2 * inner), idx_w),     # [Wk | Wv]        bf16
                pl.BlockSpec((1, inner), idx_w),         # gating bias      f32
                pl.BlockSpec((inner, D), idx_w),         # Wo               bf16
                pl.BlockSpec((1, D), idx_w),             # bo
                pl.BlockSpec((1, D), idx_w),             # LN gamma
                pl.BlockSpec((1, D), idx_w),             # LN beta
            ],
            out_specs=pl.BlockSpec((1, q_tile, D), idx_q),
            scratch_shapes=[
                pltpu.VMEM((heads, N, dim_head), jnp.bfloat16),   # K cache (per head)
                pltpu.VMEM((heads, N, dim_head), jnp.bfloat16),   # V cache (per head)
            ],
        ),
        compiler_params=pltpu.CompilerParams(
            # q-tile axis is sequential ("arbitrary") so the K/V cache persists across it;
            # megacore parallelism comes from the batch axis.
            # TODO(synk): when B == 1 and n_qt > 1, prefer a parallel q-tile axis
            # (recomputing K/V per tile) so v7x's second TensorCore is not idle.
            dimension_semantics=("parallel", "arbitrary"),
            vmem_limit_bytes=48 * 1024 * 1024,           # fits v7x's 64 MiB physical VMEM
        ),
    )(x, x_kv, w_qg, w_kv, bg_f, wo_b, bo_f, gamma_f, beta_f)


def attention_reference(x, params, *, heads, dim_head, eps=1e-5):
    """Pure-JAX f32 reference mirroring the PyTorch forward (tied=False, eval mode)."""
    wq, wkv, wg, bg, wo, bo, gamma, beta = params
    B, N, D = x.shape
    inner = heads * dim_head
    scale = dim_head ** (-0.5)

    q = x @ wq
    kv = x @ wkv
    k, v = kv[..., :inner], kv[..., inner:]

    def split_heads(t):
        return t.reshape(B, N, heads, dim_head).transpose(0, 2, 1, 3)

    q, k, v = map(split_heads, (q, k, v))
    q = q * scale
    dots = jnp.einsum('bhid,bhjd->bhij', q, k)
    attn = jax.nn.softmax(dots, axis=-1)
    out = jnp.einsum('bhij,bhjd->bhid', attn, v)
    out = out.transpose(0, 2, 1, 3).reshape(B, N, inner)
    gates = x @ wg + bg[0]
    out = out * jax.nn.sigmoid(gates)
    out = out @ wo + bo[0]
    out = x + out
    mean = jnp.mean(out, axis=-1, keepdims=True)
    var = jnp.mean((out - mean) ** 2, axis=-1, keepdims=True)
    return (out - mean) * jax.lax.rsqrt(var + eps) * gamma[0] + beta[0]


def init_params(key, dim, heads, dim_head):
    inner = heads * dim_head
    k1, k2, k3, k4 = jax.random.split(key, 4)
    s = 0.02
    wq = (s * jax.random.normal(k1, (dim, inner))).astype(jnp.float32)
    wkv = (s * jax.random.normal(k2, (dim, 2 * inner))).astype(jnp.float32)
    wo = (s * jax.random.normal(k3, (inner, dim))).astype(jnp.float32)
    bo = (s * jax.random.normal(k4, (1, dim))).astype(jnp.float32)
    # gating: weight=0, bias=1 (matches nn.init.constant_ in __init__)
    wg = jnp.zeros((dim, inner), jnp.float32)
    bg = jnp.ones((1, inner), jnp.float32)
    # LayerNorm: gamma=1, beta=0 (PyTorch default init)
    gamma = jnp.ones((1, dim), jnp.float32)
    beta = jnp.zeros((1, dim), jnp.float32)
    return (wq, wkv, wg, bg, wo, bo, gamma, beta)


if __name__ == "__main__":
    B, N, DIM = 2, 8, 32
    HEADS, DIM_HEAD = 4, 16

    key = jax.random.PRNGKey(0)
    kx, kp = jax.random.split(key)
    x = jax.random.normal(kx, (B, N, DIM), dtype=jnp.float32)
    params = init_params(kp, DIM, HEADS, DIM_HEAD)

    out = attention_forward(x, params, heads=HEADS, dim_head=DIM_HEAD)
    out = jax.block_until_ready(out)

    ref = attention_reference(x, params, heads=HEADS, dim_head=DIM_HEAD)
    assert out.shape == (B, N, DIM)
    max_err = float(jnp.max(jnp.abs(out - ref)))
    # bf16 MXU operands + approx reciprocal vs an f32 reference -> loosened tolerance
    assert jnp.allclose(out, ref, atol=2e-2, rtol=2e-2), f"mismatch vs reference (max err {max_err})"

    print("KERNEL_OK")
</pallas_src>

<mosaic_0001>
module attributes {stable_mosaic.version = 11 : i64} {
  func.func @_attention_kernel(%arg0: i32, %arg1: i32, %arg2: memref<1x8x32xf32, #tpu.memory_space<vmem>>, %arg3: memref<1x8x32xbf16, #tpu.memory_space<vmem>>, %arg4: memref<32x128xbf16, #tpu.memory_space<vmem>>, %arg5: memref<32x128xbf16, #tpu.memory_space<vmem>>, %arg6: memref<1x64xf32, #tpu.memory_space<vmem>>, %arg7: memref<64x32xbf16, #tpu.memory_space<vmem>>, %arg8: memref<1x32xf32, #tpu.memory_space<vmem>>, %arg9: memref<1x32xf32, #tpu.memory_space<vmem>>, %arg10: memref<1x32xf32, #tpu.memory_space<vmem>>, %arg11: memref<1x8x32xf32, #tpu.memory_space<vmem>>, %arg12: memref<4x8x16xbf16, #tpu.memory_space<vmem>>, %arg13: memref<4x8x16xbf16, #tpu.memory_space<vmem>>) attributes {dimension_semantics = [#tpu.dimension_semantics<parallel>, #tpu.dimension_semantics<arbitrary>], iteration_bounds = array<i64: 2, 1>, scalar_prefetch = 0 : i64, scratch_operands = 2 : i64, tpu.core_type = #tpu.core_type<tc>, window_params = [{transform_indices = @transform_0, window_bounds = array<i64: 1, 8, 32>}, {transform_indices = @transform_1, window_bounds = array<i64: 1, 8, 32>}, {pipeline_mode = #tpu.pipeline_mode<synchronous>, transform_indices = @transform_2, window_bounds = array<i64: 32, 128>}, {pipeline_mode = #tpu.pipeline_mode<synchronous>, transform_indices = @transform_3, window_bounds = array<i64: 32, 128>}, {pipeline_mode = #tpu.pipeline_mode<synchronous>, transform_indices = @transform_4, window_bounds = array<i64: 1, 64>}, {pipeline_mode = #tpu.pipeline_mode<synchronous>, transform_indices = @transform_5, window_bounds = array<i64: 64, 32>}, {pipeline_mode = #tpu.pipeline_mode<synchronous>, transform_indices = @transform_6, window_bounds = array<i64: 1, 32>}, {pipeline_mode = #tpu.pipeline_mode<synchronous>, transform_indices = @transform_7, window_bounds = array<i64: 1, 32>}, {pipeline_mode = #tpu.pipeline_mode<synchronous>, transform_indices = @transform_8, window_bounds = array<i64: 1, 32>}, {transform_indices = @transform_9, window_bounds = array<i64: 1, 8, 32>}]} {
    %c0_i32 = arith.constant 0 : i32
    %0 = arith.cmpi eq, %arg1, %c0_i32 : i32
    %1 = arith.extui %0 : i1 to i32
    %c0_i32_0 = arith.constant 0 : i32
    %2 = arith.cmpi ne, %1, %c0_i32_0 : i32
    scf.if %2 {
      %c0_62 = arith.constant 0 : index
      %c0_63 = arith.constant 0 : index
      %c0_64 = arith.constant 0 : index
      %127 = vector.load %arg3[%c0_62, %c0_63, %c0_64] : memref<1x8x32xbf16, #tpu.memory_space<vmem>>, vector<1x8x32xbf16>
      %128 = vector.shape_cast %127 : vector<1x8x32xbf16> to vector<8x32xbf16>
      %c0_65 = arith.constant 0 : index
      %c0_66 = arith.constant 0 : index
      %129 = vector.load %arg5[%c0_65, %c0_66] : memref<32x128xbf16, #tpu.memory_space<vmem>>, vector<32x128xbf16>
      %cst_67 = arith.constant dense<0.000000e+00> : vector<8x128xf32>
      %130 = tpu.matmul %128, %129, %cst_67 {dimension_numbers = #tpu.dot_dimension_numbers<[1], [0], [0], [1], [0, 0, 1, 1], [], []>} : vector<8x32xbf16>, vector<32x128xbf16>, vector<8x128xf32> -> vector<8x128xf32>
      %131 = arith.truncf %130 : vector<8x128xf32> to vector<8x128xbf16>
      %132 = vector.extract_strided_slice %131 {offsets = [0, 0], sizes = [8, 16], strides = [1, 1]} : vector<8x128xbf16> to vector<8x16xbf16>
      %c0_68 = arith.constant 0 : index
      %c0_69 = arith.constant 0 : index
      %c0_70 = arith.constant 0 : index
      %133 = vector.load %arg12[%c0_68, %c0_69, %c0_70] : memref<4x8x16xbf16, #tpu.memory_space<vmem>>, vector<1x8x16xbf16>
      %134 = vector.shape_cast %133 : vector<1x8x16xbf16> to vector<8x16xbf16>
      %135 = vector.shape_cast %132 : vector<8x16xbf16> to vector<1x8x16xbf16>
      tpu.vector_store %arg12[%c0_68, %c0_69, %c0_70], %135 {strides = array<i32>} : memref<4x8x16xbf16, #tpu.memory_space<vmem>>, vector<1x8x16xbf16>,
      %136 = vector.extract_strided_slice %131 {offsets = [0, 64], sizes = [8, 16], strides = [1, 1]} : vector<8x128xbf16> to vector<8x16xbf16>
      %c0_71 = arith.constant 0 : index
      %c0_72 = arith.constant 0 : index
      %c0_73 = arith.constant 0 : index
      %137 = vector.load %arg13[%c0_71, %c0_72, %c0_73] : memref<4x8x16xbf16, #tpu.memory_space<vmem>>, vector<1x8x16xbf16>
      %138 = vector.shape_cast %137 : vector<1x8x16xbf16> to vector<8x16xbf16>
      %139 = vector.shape_cast %136 : vector<8x16xbf16> to vector<1x8x16xbf16>
      tpu.vector_store %arg13[%c0_71, %c0_72, %c0_73], %139 {strides = array<i32>} : memref<4x8x16xbf16, #tpu.memory_space<vmem>>, vector<1x8x16xbf16>,
      %140 = vector.extract_strided_slice %131 {offsets = [0, 16], sizes = [8, 16], strides = [1, 1]} : vector<8x128xbf16> to vector<8x16xbf16>
      %c1_74 = arith.constant 1 : index
      %c0_75 = arith.constant 0 : index
      %c0_76 = arith.constant 0 : index
      %141 = vector.load %arg12[%c1_74, %c0_75, %c0_76] : memref<4x8x16xbf16, #tpu.memory_space<vmem>>, vector<1x8x16xbf16>
      %142 = vector.shape_cast %141 : vector<1x8x16xbf16> to vector<8x16xbf16>
      %143 = vector.shape_cast %140 : vector<8x16xbf16> to vector<1x8x16xbf16>
      tpu.vector_store %arg12[%c1_74, %c0_75, %c0_76], %143 {strides = array<i32>} : memref<4x8x16xbf16, #tpu.memory_space<vmem>>, vector<1x8x16xbf16>,
      %144 = vector.extract_strided_slice %131 {offsets = [0, 80], sizes = [8, 16], strides = [1, 1]} : vector<8x128xbf16> to vector<8x16xbf16>
      %c1_77 = arith.constant 1 : index
      %c0_78 = arith.constant 0 : index
      %c0_79 = arith.constant 0 : index
      %145 = vector.load %arg13[%c1_77, %c0_78, %c0_79] : memref<4x8x16xbf16, #tpu.memory_space<vmem>>, vector<1x8x16xbf16>
      %146 = vector.shape_cast %145 : vector<1x8x16xbf16> to vector<8x16xbf16>
      %147 = vector.shape_cast %144 : vector<8x16xbf16> to vector<1x8x16xbf16>
      tpu.vector_store %arg13[%c1_77, %c0_78, %c0_79], %147 {strides = array<i32>} : memref<4x8x16xbf16, #tpu.memory_space<vmem>>, vector<1x8x16xbf16>,
      %148 = vector.extract_strided_slice %131 {offsets = [0, 32], sizes = [8, 16], strides = [1, 1]} : vector<8x128xbf16> to vector<8x16xbf16>
      %c2_80 = arith.constant 2 : index
      %c0_81 = arith.constant 0 : index
      %c0_82 = arith.constant 0 : index
      %149 = vector.load %arg12[%c2_80, %c0_81, %c0_82] : memref<4x8x16xbf16, #tpu.memory_space<vmem>>, vector<1x8x16xbf16>
      %150 = vector.shape_cast %149 : vector<1x8x16xbf16> to vector<8x16xbf16>
      %151 = vector.shape_cast %148 : vector<8x16xbf16> to vector<1x8x16xbf16>
      tpu.vector_store %arg12[%c2_80, %c0_81, %c0_82], %151 {strides = array<i32>} : memref<4x8x16xbf16, #tpu.memory_space<vmem>>, vector<1x8x16xbf16>,
      %152 = vector.extract_strided_slice %131 {offsets = [0, 96], sizes = [8, 16], strides = [1, 1]} : vector<8x128xbf16> to vector<8x16xbf16>
      %c2_83 = arith.constant 2 : index
      %c0_84 = arith.constant 0 : index
      %c0_85 = arith.constant 0 : index
      %153 = vector.load %arg13[%c2_83, %c0_84, %c0_85] : memref<4x8x16xbf16, #tpu.memory_space<vmem>>, vector<1x8x16xbf16>
      %154 = vector.shape_cast %153 : vector<1x8x16xbf16> to vector<8x16xbf16>
      %155 = vector.shape_cast %152 : vector<8x16xbf16> to vector<1x8x16xbf16>
      tpu.vector_store %arg13[%c2_83, %c0_84, %c0_85], %155 {strides = array<i32>} : memref<4x8x16xbf16, #tpu.memory_space<vmem>>, vector<1x8x16xbf16>,
      %156 = vector.extract_strided_slice %131 {offsets = [0, 48], sizes = [8, 16], strides = [1, 1]} : vector<8x128xbf16> to vector<8x16xbf16>
      %c3_86 = arith.constant 3 : index
      %c0_87 = arith.constant 0 : index
      %c0_88 = arith.constant 0 : index
      %157 = vector.load %arg12[%c3_86, %c0_87, %c0_88] : memref<4x8x16xbf16, #tpu.memory_space<vmem>>, vector<1x8x16xbf16>
      %158 = vector.shape_cast %157 : vector<1x8x16xbf16> to vector<8x16xbf16>
      %159 = vector.shape_cast %156 : vector<8x16xbf16> to vector<1x8x16xbf16>
      tpu.vector_store %arg12[%c3_86, %c0_87, %c0_88], %159 {strides = array<i32>} : memref<4x8x16xbf16, #tpu.memory_space<vmem>>, vector<1x8x16xbf16>,
      %160 = vector.extract_strided_slice %131 {offsets = [0, 112], sizes = [8, 16], strides = [1, 1]} : vector<8x128xbf16> to vector<8x16xbf16>
      %c3_89 = arith.constant 3 : index
      %c0_90 = arith.constant 0 : index
      %c0_91 = arith.constant 0 : index
      %161 = vector.load %arg13[%c3_89, %c0_90, %c0_91] : memref<4x8x16xbf16, #tpu.memory_space<vmem>>, vector<1x8x16xbf16>
      %162 = vector.shape_cast %161 : vector<1x8x16xbf16> to vector<8x16xbf16>
      %163 = vector.shape_cast %160 : vector<8x16xbf16> to vector<1x8x16xbf16>
      tpu.vector_store %arg13[%c3_89, %c0_90, %c0_91], %163 {strides = array<i32>} : memref<4x8x16xbf16, #tpu.memory_space<vmem>>, vector<1x8x16xbf16>,
    } else {
    }
    %c0 = arith.constant 0 : index
    %c0_1 = arith.constant 0 : index
    %c0_2 = arith.constant 0 : index
    %3 = vector.load %arg2[%c0, %c0_1, %c0_2] : memref<1x8x32xf32, #tpu.memory_space<vmem>>, vector<1x8x32xf32>
    %4 = vector.shape_cast %3 : vector<1x8x32xf32> to vector<8x32xf32>
    %5 = arith.truncf %4 : vector<8x32xf32> to vector<8x32xbf16>
    %c0_3 = arith.constant 0 : index
    %c0_4 = arith.constant 0 : index
    %6 = vector.load %arg4[%c0_3, %c0_4] : memref<32x128xbf16, #tpu.memory_space<vmem>>, vector<32x128xbf16>
    %cst = arith.constant dense<0.000000e+00> : vector<8x128xf32>
    %7 = tpu.matmul %5, %6, %cst {dimension_numbers = #tpu.dot_dimension_numbers<[1], [0], [0], [1], [0, 0, 1, 1], [], []>} : vector<8x32xbf16>, vector<32x128xbf16>, vector<8x128xf32> -> vector<8x128xf32>
    %8 = vector.extract_strided_slice %7 {offsets = [0, 64], sizes = [8, 64], strides = [1, 1]} : vector<8x128xf32> to vector<8x64xf32>
    %c0_5 = arith.constant 0 : index
    %c0_6 = arith.constant 0 : index
    %9 = vector.load %arg6[%c0_5, %c0_6] : memref<1x64xf32, #tpu.memory_space<vmem>>, vector<1x64xf32>
    %10 = vector.broadcast %9 : vector<1x64xf32> to vector<8x64xf32>
    %11 = arith.addf %8, %10 : vector<8x64xf32>
    %12 = arith.negf %11 : vector<8x64xf32>
    %13 = math.exp %12 : vector<8x64xf32>
    %cst_7 = arith.constant 1.000000e+00 : f32
    %14 = vector.broadcast %cst_7 : f32 to vector<8x64xf32>
    %15 = arith.addf %14, %13 : vector<8x64xf32>
    %16 = arith.divf %14, %15 : vector<8x64xf32>
    %17 = vector.extract_strided_slice %7 {offsets = [0, 0], sizes = [8, 16], strides = [1, 1]} : vector<8x128xf32> to vector<8x16xf32>
    %18 = arith.truncf %17 : vector<8x16xf32> to vector<8x16xbf16>
    %c0_8 = arith.constant 0 : index
    %c0_9 = arith.constant 0 : index
    %c0_10 = arith.constant 0 : index
    %19 = vector.load %arg12[%c0_8, %c0_9, %c0_10] : memref<4x8x16xbf16, #tpu.memory_space<vmem>>, vector<1x8x16xbf16>
    %20 = vector.shape_cast %19 : vector<1x8x16xbf16> to vector<8x16xbf16>
    %cst_11 = arith.constant dense<0.000000e+00> : vector<8x8xf32>
    %21 = tpu.matmul %18, %20, %cst_11 {dimension_numbers = #tpu.dot_dimension_numbers<[1], [1], [0], [0], [0, 0, 1, 0], [], []>} : vector<8x16xbf16>, vector<8x16xbf16>, vector<8x8xf32> -> vector<8x8xf32>
    %cst_12 = arith.constant dense<0xFF800000> : vector<8xf32>
    %22 = vector.multi_reduction <maximumf>, %21, %cst_12 [1] : vector<8x8xf32> to vector<8xf32>
    %23 = vector.shape_cast %22 : vector<8xf32> to vector<8x1xf32>
    %24 = vector.broadcast %23 : vector<8x1xf32> to vector<8x8xf32>
    %25 = arith.subf %21, %24 : vector<8x8xf32>
    %26 = math.exp %25 : vector<8x8xf32>
    %cst_13 = arith.constant dense<0.000000e+00> : vector<8xf32>
    %27 = vector.multi_reduction <add>, %26, %cst_13 [1] : vector<8x8xf32> to vector<8xf32>
    %28 = vector.shape_cast %27 : vector<8xf32> to vector<8x1xf32>
    %29 = arith.truncf %26 : vector<8x8xf32> to vector<8x8xbf16>
    %c0_14 = arith.constant 0 : index
    %c0_15 = arith.constant 0 : index
    %c0_16 = arith.constant 0 : index
    %30 = vector.load %arg13[%c0_14, %c0_15, %c0_16] : memref<4x8x16xbf16, #tpu.memory_space<vmem>>, vector<1x8x16xbf16>
    %31 = vector.shape_cast %30 : vector<1x8x16xbf16> to vector<8x16xbf16>
    %cst_17 = arith.constant dense<0.000000e+00> : vector<8x16xf32>
    %32 = tpu.matmul %29, %31, %cst_17 {dimension_numbers = #tpu.dot_dimension_numbers<[1], [0], [0], [1], [0, 0, 1, 1], [], []>} : vector<8x8xbf16>, vector<8x16xbf16>, vector<8x16xf32> -> vector<8x16xf32>
    %33 = tpu.reciprocal %28 {approx = true} : vector<8x1xf32> -> vector<8x1xf32>
    %34 = vector.broadcast %33 : vector<8x1xf32> to vector<8x16xf32>
    %35 = arith.mulf %32, %34 : vector<8x16xf32>
    %36 = vector.extract_strided_slice %7 {offsets = [0, 16], sizes = [8, 16], strides = [1, 1]} : vector<8x128xf32> to vector<8x16xf32>
    %37 = arith.truncf %36 : vector<8x16xf32> to vector<8x16xbf16>
    %c1 = arith.constant 1 : index
    %c0_18 = arith.constant 0 : index
    %c0_19 = arith.constant 0 : index
    %38 = vector.load %arg12[%c1, %c0_18, %c0_19] : memref<4x8x16xbf16, #tpu.memory_space<vmem>>, vector<1x8x16xbf16>
    %39 = vector.shape_cast %38 : vector<1x8x16xbf16> to vector<8x16xbf16>
    %cst_20 = arith.constant dense<0.000000e+00> : vector<8x8xf32>
    %40 = tpu.matmul %37, %39, %cst_20 {dimension_numbers = #tpu.dot_dimension_numbers<[1], [1], [0], [0], [0, 0, 1, 0], [], []>} : vector<8x16xbf16>, vector<8x16xbf16>, vector<8x8xf32> -> vector<8x8xf32>
    %cst_21 = arith.constant dense<0xFF800000> : vector<8xf32>
    %41 = vector.multi_reduction <maximumf>, %40, %cst_21 [1] : vector<8x8xf32> to vector<8xf32>
    %42 = vector.shape_cast %41 : vector<8xf32> to vector<8x1xf32>
    %43 = vector.broadcast %42 : vector<8x1xf32> to vector<8x8xf32>
    %44 = arith.subf %40, %43 : vector<8x8xf32>
    %45 = math.exp %44 : vector<8x8xf32>
    %cst_22 = arith.constant dense<0.000000e+00> : vector<8xf32>
    %46 = vector.multi_reduction <add>, %45, %cst_22 [1] : vector<8x8xf32> to vector<8xf32>
    %47 = vector.shape_cast %46 : vector<8xf32> to vector<8x1xf32>
    %48 = arith.truncf %45 : vector<8x8xf32> to vector<8x8xbf16>
    %c1_23 = arith.constant 1 : index
    %c0_24 = arith.constant 0 : index
    %c0_25 = arith.constant 0 : index
    %49 = vector.load %arg13[%c1_23, %c0_24, %c0_25] : memref<4x8x16xbf16, #tpu.memory_space<vmem>>, vector<1x8x16xbf16>
    %50 = vector.shape_cast %49 : vector<1x8x16xbf16> to vector<8x16xbf16>
    %cst_26 = arith.constant dense<0.000000e+00> : vector<8x16xf32>
    %51 = tpu.matmul %48, %50, %cst_26 {dimension_numbers = #tpu.dot_dimension_numbers<[1], [0], [0], [1], [0, 0, 1, 1], [], []>} : vector<8x8xbf16>, vector<8x16xbf16>, vector<8x16xf32> -> vector<8x16xf32>
    %52 = tpu.reciprocal %47 {approx = true} : vector<8x1xf32> -> vector<8x1xf32>
    %53 = vector.broadcast %52 : vector<8x1xf32> to vector<8x16xf32>
    %54 = arith.mulf %51, %53 : vector<8x16xf32>
    %55 = vector.extract_strided_slice %7 {offsets = [0, 32], sizes = [8, 16], strides = [1, 1]} : vector<8x128xf32> to vector<8x16xf32>
    %56 = arith.truncf %55 : vector<8x16xf32> to vector<8x16xbf16>
    %c2 = arith.constant 2 : index
    %c0_27 = arith.constant 0 : index
    %c0_28 = arith.constant 0 : index
    %57 = vector.load %arg12[%c2, %c0_27, %c0_28] : memref<4x8x16xbf16, #tpu.memory_space<vmem>>, vector<1x8x16xbf16>
    %58 = vector.shape_cast %57 : vector<1x8x16xbf16> to vector<8x16xbf16>
    %cst_29 = arith.constant dense<0.000000e+00> : vector<8x8xf32>
    %59 = tpu.matmul %56, %58, %cst_29 {dimension_numbers = #tpu.dot_dimension_numbers<[1], [1], [0], [0], [0, 0, 1, 0], [], []>} : vector<8x16xbf16>, vector<8x16xbf16>, vector<8x8xf32> -> vector<8x8xf32>
    %cst_30 = arith.constant dense<0xFF800000> : vector<8xf32>
    %60 = vector.multi_reduction <maximumf>, %59, %cst_30 [1] : vector<8x8xf32> to vector<8xf32>
    %61 = vector.shape_cast %60 : vector<8xf32> to vector<8x1xf32>
    %62 = vector.broadcast %61 : vector<8x1xf32> to vector<8x8xf32>
    %63 = arith.subf %59, %62 : vector<8x8xf32>
    %64 = math.exp %63 : vector<8x8xf32>
    %cst_31 = arith.constant dense<0.000000e+00> : vector<8xf32>
    %65 = vector.multi_reduction <add>, %64, %cst_31 [1] : vector<8x8xf32> to vector<8xf32>
    %66 = vector.shape_cast %65 : vector<8xf32> to vector<8x1xf32>
    %67 = arith.truncf %64 : vector<8x8xf32> to vector<8x8xbf16>
    %c2_32 = arith.constant 2 : index
    %c0_33 = arith.constant 0 : index
    %c0_34 = arith.constant 0 : index
    %68 = vector.load %arg13[%c2_32, %c0_33, %c0_34] : memref<4x8x16xbf16, #tpu.memory_space<vmem>>, vector<1x8x16xbf16>
    %69 = vector.shape_cast %68 : vector<1x8x16xbf16> to vector<8x16xbf16>
    %cst_35 = arith.constant dense<0.000000e+00> : vector<8x16xf32>
    %70 = tpu.matmul %67, %69, %cst_35 {dimension_numbers = #tpu.dot_dimension_numbers<[1], [0], [0], [1], [0, 0, 1, 1], [], []>} : vector<8x8xbf16>, vector<8x16xbf16>, vector<8x16xf32> -> vector<8x16xf32>
    %71 = tpu.reciprocal %66 {approx = true} : vector<8x1xf32> -> vector<8x1xf32>
    %72 = vector.broadcast %71 : vector<8x1xf32> to vector<8x16xf32>
    %73 = arith.mulf %70, %72 : vector<8x16xf32>
    %74 = vector.extract_strided_slice %7 {offsets = [0, 48], sizes = [8, 16], strides = [1, 1]} : vector<8x128xf32> to vector<8x16xf32>
    %75 = arith.truncf %74 : vector<8x16xf32> to vector<8x16xbf16>
    %c3 = arith.constant 3 : index
    %c0_36 = arith.constant 0 : index
    %c0_37 = arith.constant 0 : index
    %76 = vector.load %arg12[%c3, %c0_36, %c0_37] : memref<4x8x16xbf16, #tpu.memory_space<vmem>>, vector<1x8x16xbf16>
    %77 = vector.shape_cast %76 : vector<1x8x16xbf16> to vector<8x16xbf16>
    %cst_38 = arith.constant dense<0.000000e+00> : vector<8x8xf32>
    %78 = tpu.matmul %75, %77, %cst_38 {dimension_numbers = #tpu.dot_dimension_numbers<[1], [1], [0], [0], [0, 0, 1, 0], [], []>} : vector<8x16xbf16>, vector<8x16xbf16>, vector<8x8xf32> -> vector<8x8xf32>
    %cst_39 = arith.constant dense<0xFF800000> : vector<8xf32>
    %79 = vector.multi_reduction <maximumf>, %78, %cst_39 [1] : vector<8x8xf32> to vector<8xf32>
    %80 = vector.shape_cast %79 : vector<8xf32> to vector<8x1xf32>
    %81 = vector.broadcast %80 : vector<8x1xf32> to vector<8x8xf32>
    %82 = arith.subf %78, %81 : vector<8x8xf32>
    %83 = math.exp %82 : vector<8x8xf32>
    %cst_40 = arith.constant dense<0.000000e+00> : vector<8xf32>
    %84 = vector.multi_reduction <add>, %83, %cst_40 [1] : vector<8x8xf32> to vector<8xf32>
    %85 = vector.shape_cast %84 : vector<8xf32> to vector<8x1xf32>
    %86 = arith.truncf %83 : vector<8x8xf32> to vector<8x8xbf16>
    %c3_41 = arith.constant 3 : index
    %c0_42 = arith.constant 0 : index
    %c0_43 = arith.constant 0 : index
    %87 = vector.load %arg13[%c3_41, %c0_42, %c0_43] : memref<4x8x16xbf16, #tpu.memory_space<vmem>>, vector<1x8x16xbf16>
    %88 = vector.shape_cast %87 : vector<1x8x16xbf16> to vector<8x16xbf16>
    %cst_44 = arith.constant dense<0.000000e+00> : vector<8x16xf32>
    %89 = tpu.matmul %86, %88, %cst_44 {dimension_numbers = #tpu.dot_dimension_numbers<[1], [0], [0], [1], [0, 0, 1, 1], [], []>} : vector<8x8xbf16>, vector<8x16xbf16>, vector<8x16xf32> -> vector<8x16xf32>
    %90 = tpu.reciprocal %85 {approx = true} : vector<8x1xf32> -> vector<8x1xf32>
    %91 = vector.broadcast %90 : vector<8x1xf32> to vector<8x16xf32>
    %92 = arith.mulf %89, %91 : vector<8x16xf32>
    %93 = tpu.concatenate %35, %54, %73, %92 in 1 : vector<8x16xf32>, vector<8x16xf32>, vector<8x16xf32>, vector<8x16xf32> -> vector<8x64xf32>
    %94 = arith.mulf %93, %16 : vector<8x64xf32>
    %95 = arith.truncf %94 : vector<8x64xf32> to vector<8x64xbf16>
    %c0_45 = arith.constant 0 : index
    %c0_46 = arith.constant 0 : index
    %96 = vector.load %arg7[%c0_45, %c0_46] : memref<64x32xbf16, #tpu.memory_space<vmem>>, vector<64x32xbf16>
    %cst_47 = arith.constant dense<0.000000e+00> : vector<8x32xf32>
    %97 = tpu.matmul %95, %96, %cst_47 {dimension_numbers = #tpu.dot_dimension_numbers<[1], [0], [0], [1], [0, 0, 1, 1], [], []>} : vector<8x64xbf16>, vector<64x32xbf16>, vector<8x32xf32> -> vector<8x32xf32>
    %98 = arith.addf %4, %97 : vector<8x32xf32>
    %c0_48 = arith.constant 0 : index
    %c0_49 = arith.constant 0 : index
    %99 = vector.load %arg8[%c0_48, %c0_49] : memref<1x32xf32, #tpu.memory_space<vmem>>, vector<1x32xf32>
    %100 = vector.broadcast %99 : vector<1x32xf32> to vector<8x32xf32>
    %101 = arith.addf %98, %100 : vector<8x32xf32>
    %cst_50 = arith.constant dense<0.000000e+00> : vector<8xf32>
    %102 = vector.multi_reduction <add>, %101, %cst_50 [1] : vector<8x32xf32> to vector<8xf32>
    %103 = vector.shape_cast %102 : vector<8xf32> to vector<8x1xf32>
    %cst_51 = arith.constant 3.200000e+01 : f32
    %104 = vector.broadcast %cst_51 : f32 to vector<8x1xf32>
    %105 = arith.divf %103, %104 : vector<8x1xf32>
    %106 = vector.broadcast %105 : vector<8x1xf32> to vector<8x32xf32>
    %107 = arith.subf %101, %106 : vector<8x32xf32>
    %108 = arith.mulf %107, %107 : vector<8x32xf32>
    %cst_52 = arith.constant dense<0.000000e+00> : vector<8xf32>
    %109 = vector.multi_reduction <add>, %108, %cst_52 [1] : vector<8x32xf32> to vector<8xf32>
    %110 = vector.shape_cast %109 : vector<8xf32> to vector<8x1xf32>
    %cst_53 = arith.constant 3.200000e+01 : f32
    %111 = vector.broadcast %cst_53 : f32 to vector<8x1xf32>
    %112 = arith.divf %110, %111 : vector<8x1xf32>
    %cst_54 = arith.constant 9.99999974E-6 : f32
    %113 = vector.broadcast %cst_54 : f32 to vector<8x1xf32>
    %114 = arith.addf %112, %113 : vector<8x1xf32>
    %115 = math.rsqrt %114 : vector<8x1xf32>
    %116 = vector.broadcast %115 : vector<8x1xf32> to vector<8x32xf32>
    %117 = arith.mulf %107, %116 : vector<8x32xf32>
    %c0_55 = arith.constant 0 : index
    %c0_56 = arith.constant 0 : index
    %118 = vector.load %arg9[%c0_55, %c0_56] : memref<1x32xf32, #tpu.memory_space<vmem>>, vector<1x32xf32>
    %119 = vector.broadcast %118 : vector<1x32xf32> to vector<8x32xf32>
    %120 = arith.mulf %117, %119 : vector<8x32xf32>
    %c0_57 = arith.constant 0 : index
    %c0_58 = arith.constant 0 : index
    %121 = vector.load %arg10[%c0_57, %c0_58] : memref<1x32xf32, #tpu.memory_space<vmem>>, vector<1x32xf32>
    %122 = vector.broadcast %121 : vector<1x32xf32> to vector<8x32xf32>
    %123 = arith.addf %120, %122 : vector<8x32xf32>
    %c0_59 = arith.constant 0 : index
    %c0_60 = arith.constant 0 : index
    %c0_61 = arith.constant 0 : index
    %124 = vector.load %arg11[%c0_59, %c0_60, %c0_61] : memref<1x8x32xf32, #tpu.memory_space<vmem>>, vector<1x8x32xf32>
    %125 = vector.shape_cast %124 : vector<1x8x32xf32> to vector<8x32xf32>
    %126 = vector.shape_cast %123 : vector<8x32xf32> to vector<1x8x32xf32>
    tpu.vector_store %arg11[%c0_59, %c0_60, %c0_61], %126 {strides = array<i32>} : memref<1x8x32xf32, #tpu.memory_space<vmem>>, vector<1x8x32xf32>,
    return
  }
  func.func @transform_0(%arg0: i32, %arg1: i32) -> (i32, i32, i32) {
    %c0_i32 = arith.constant 0 : i32
    %c0_i32_0 = arith.constant 0 : i32
    return %arg0, %arg1, %c0_i32 : i32, i32, i32
  }
  func.func @transform_1(%arg0: i32, %arg1: i32) -> (i32, i32, i32) {
    %c0_i32 = arith.constant 0 : i32
    %c0_i32_0 = arith.constant 0 : i32
    %c0_i32_1 = arith.constant 0 : i32
    return %arg0, %c0_i32, %c0_i32_0 : i32, i32, i32
  }
  func.func @transform_2(%arg0: i32, %arg1: i32) -> (i32, i32) {
    %c0_i32 = arith.constant 0 : i32
    %c0_i32_0 = arith.constant 0 : i32
    %c0_i32_1 = arith.constant 0 : i32
    return %c0_i32, %c0_i32_0 : i32, i32
  }
  func.func @transform_3(%arg0: i32, %arg1: i32) -> (i32, i32) {
    %c0_i32 = arith.constant 0 : i32
    %c0_i32_0 = arith.constant 0 : i32
    %c0_i32_1 = arith.constant 0 : i32
    return %c0_i32, %c0_i32_0 : i32, i32
  }
  func.func @transform_4(%arg0: i32, %arg1: i32) -> (i32, i32) {
    %c0_i32 = arith.constant 0 : i32
    %c0_i32_0 = arith.constant 0 : i32
    %c0_i32_1 = arith.constant 0 : i32
    return %c0_i32, %c0_i32_0 : i32, i32
  }
  func.func @transform_5(%arg0: i32, %arg1: i32) -> (i32, i32) {
    %c0_i32 = arith.constant 0 : i32
    %c0_i32_0 = arith.constant 0 : i32
    %c0_i32_1 = arith.constant 0 : i32
    return %c0_i32, %c0_i32_0 : i32, i32
  }
  func.func @transform_6(%arg0: i32, %arg1: i32) -> (i32, i32) {
    %c0_i32 = arith.constant 0 : i32
    %c0_i32_0 = arith.constant 0 : i32
    %c0_i32_1 = arith.constant 0 : i32
    return %c0_i32, %c0_i32_0 : i32, i32
  }
  func.func @transform_7(%arg0: i32, %arg1: i32) -> (i32, i32) {
    %c0_i32 = arith.constant 0 : i32
    %c0_i32_0 = arith.constant 0 : i32
    %c0_i32_1 = arith.constant 0 : i32
    return %c0_i32, %c0_i32_0 : i32, i32
  }
  func.func @transform_8(%arg0: i32, %arg1: i32) -> (i32, i32) {
    %c0_i32 = arith.constant 0 : i32
    %c0_i32_0 = arith.constant 0 : i32
    %c0_i32_1 = arith.constant 0 : i32
    return %c0_i32, %c0_i32_0 : i32, i32
  }
  func.func @transform_9(%arg0: i32, %arg1: i32) -> (i32, i32, i32) {
    %c0_i32 = arith.constant 0 : i32
    %c0_i32_0 = arith.constant 0 : i32
    return %arg0, %arg1, %c0_i32 : i32, i32, i32
  }
}

</mosaic_0001>

<llo_original>
// kernel: tpu_custom_call.1
$region0: #{tpu_custom_call.1}
  #allocation0 [shape = 'u32[]', space=smem, size = 0x4, offset = 0x4, fixed_abs, tag = 'smem constant byte address 0x4 - core index']
  #allocation1 [shape = 'u32[144,128]{1,0:T(1,128)}', space=vmem, size = 0x12000, scoped, tag = 'internal scratch']
  #allocation2 [shape = 'bf16[4,8,16]{2,1,0:T(8,128)(2,1)}', space=vmem, size = 0x2000, scoped, tag = 'scratch operand']
  #allocation3 [shape = 'bf16[4,8,16]{2,1,0:T(8,128)(2,1)}', space=vmem, size = 0x2000, scoped, tag = 'scratch operand']
  %s0 = inlined_call_operand.vmem [shape: f32[2,8,32], index: 0, kind: input, shape index: {}]
  %s1 = inlined_call_operand.hbm [shape: bf16[2,8,32], index: 1, kind: input, shape index: {}]
  %s2 = inlined_call_operand.vmem [shape: bf16[32,128], index: 2, kind: input, shape index: {}]
  %s3 = inlined_call_operand.vmem [shape: bf16[32,128], index: 3, kind: input, shape index: {}]
  %s4 = inlined_call_operand.vmem [shape: f32[1,64], index: 4, kind: input, shape index: {}]
  %s5 = inlined_call_operand.vmem [shape: bf16[64,32], index: 5, kind: input, shape index: {}]
  %s6 = inlined_call_operand.vmem [shape: f32[1,32], index: 6, kind: input, shape index: {}]
  %s7 = inlined_call_operand.vmem [shape: f32[1,32], index: 7, kind: input, shape index: {}]
  %s8 = inlined_call_operand.vmem [shape: f32[1,32], index: 8, kind: input, shape index: {}]
  %s9 = inlined_call_operand.hbm [shape: f32[2,8,32], index: 9, kind: output, shape index: {}]
  %s10 = sld [smem:[#allocation0]]
  $region77: #{tpu_custom_call.1} parent=0
    _
  %s12 = ssub.s32 1, %s10
  %s13 = scalar_select 0, %s12, %s10
  $region1: #{tpu_custom_call.1} parent=0
    #allocation4 [shape = 'u8[4096]{0}', space=vmem, size = 0x1000, scoped, tag = 'input window, operand 1']
    #allocation5 [shape = 's32[2]{0}', space=sflag, size = 0x8, scoped, tag = 'scoped memory for tpu_custom_call.1']
    #allocation6 [shape = 's32[2]{0}', space=sflag, size = 0x8, scoped, tag = 'scoped memory for tpu_custom_call.1']
    #allocation7 [shape = 'u8[8192]{0}', space=vmem, size = 0x2000, scoped, tag = 'output window, operand 0']
    %14 = vsyncpa [#allocation5], 0
    %s15 = scalar_lea.sflag [#allocation5], 1
    %16 = vsyncpa %s15, 0
    %17 = vsyncpa [#allocation6], 0
    %s18 = scalar_lea.sflag [#allocation6], 1
    %19 = vsyncpa %s18, 0
    loop: start=0, step=1, limit=4
    $region2: #{tpu_custom_call.1} parent=1 // loop_pre_header
      _
    $region3: #{tpu_custom_call.1} parent=1 // loop_header
      %s21 = sphi 0, %s25
      %p22 = scmp.ge.s32.totalorder %s21, 4
      %s28 = sphi 0, %s40
      %s29 = sphi 0, %s36
      %s30 = sphi 0, %s28
      %s31 = sphi 0, %s29
      %s32 = sphi 0, %s30
      %s33 = sphi 0, %s31
      %s45 = sphi 0, %s47
      %s48 = sphi 0, %s45
      %s49 = sphi 0, %s48
      %s65 = sphi 0, %s49
      %s71 = sphi 0, %s73
      %s74 = sphi 0, %s71
      %s75 = sphi 0, %s74
      %s91 = sphi 0, %s75
      %s95 = sphi 0, %s95
      %s97 = sphi 0, %s95
      %s98 = sphi 0, %s97
      %s112 = sphi 0, %s98
      %s116 = sphi 0, %s116
      %s118 = sphi 0, %s116
      %s119 = sphi 0, %s118
      %s133 = sphi 0, %s119
      %s137 = sphi 0, %s137
      %s139 = sphi 0, %s137
      %s140 = sphi 0, %s139
      %s154 = sphi 0, %s140
      %s158 = sphi 0, %s158
      %s160 = sphi 0, %s158
      %s161 = sphi 0, %s160
      %s175 = sphi 0, %s161
      %s179 = sphi 0, %s179
      %s181 = sphi 0, %s179
      %s182 = sphi 0, %s181
      %s196 = sphi 0, %s182
      %s200 = sphi 0, %s200
      %s202 = sphi 0, %s200
      %s203 = sphi 0, %s202
      %s217 = sphi 0, %s203
      %s221 = sphi 0, %s221
      %s223 = sphi 0, %s221
      %s224 = sphi 0, %s223
      %s238 = sphi 0, %s224
      %s246 = sphi 0, %s248
      %s249 = sphi 0, %s246
      %s250 = sphi 0, %s249
      %s266 = sphi 0, %s250
    $region4: #{tpu_custom_call.1} parent=1 // loop_header_branch
      %24 = sbr.rel (%p22) target = $region8
    $region5: #{tpu_custom_call.1} parent=1 // loop_body
      %s26 = ssub.s32 %s21, 1
      %s27 = ssub.s32 %s21, 2
      %s34 = sadd.s32 1, %s29
      %p35 = scmp.ge.s32.totalorder %s34, 1
      %s36 = scalar_select %p35, 0, %s34
      %s37 = sadd.s32 1, %s28
      %s38 = scalar_select %p35, %s37, %s28
      %p39 = scmp.ge.s32.totalorder %s38, 2
      %s40 = scalar_select %p39, 0, %s38
      %s41 = ssub.s32 %s28, %s40
      %s42 = ssub.s32 %s29, %s36
      %s43 = sor.u32 %s41, %s42
      %p44 = scmp.eq.s32.totalorder %s43, 0
      %s46 = sadd.s32 %s45, 1
      %s47 = scalar_select %p44, %s45, %s46
      %p50 = pneg %p44
      %p51 = scmp.eq.s32.totalorder %s21, 1
      %p52 = por %p50, %p51
      %p53 = scmp.ne.s32.totalorder %s45, %s48
      %p54 = scmp.eq.s32.totalorder %s21, 0
      %p55 = por %p53, %p54
      %p56 = scmp.ne.s32.totalorder %s45, %s48
      %p57 = scmp.eq.s32.totalorder %s26, 1
      %p58 = por %p56, %p57
      %p59 = scmp.ne.s32.totalorder %s48, %s49
      %p60 = scmp.eq.s32.totalorder %s26, 0
      %p61 = por %p59, %p60
      %p62 = scmp.ne.s32.totalorder %s48, %s49
      %p63 = scmp.eq.s32.totalorder %s27, 1
      %p64 = por %p62, %p63
      %p66 = scmp.ne.s32.totalorder %s49, %s65
      %p67 = scmp.eq.s32.totalorder %s27, 0
      %p68 = por %p66, %p67
      %s69 = ssub.s32 %s28, %s40
      %p70 = scmp.eq.s32.totalorder %s69, 0
      %s72 = sadd.s32 %s71, 1
      %s73 = scalar_select %p70, %s71, %s72
      %p76 = pneg %p70
      %p77 = scmp.eq.s32.totalorder %s21, 1
      %p78 = por %p76, %p77
      %p79 = scmp.ne.s32.totalorder %s71, %s74
      %p80 = scmp.eq.s32.totalorder %s21, 0
      %p81 = por %p79, %p80
      %p82 = scmp.ne.s32.totalorder %s71, %s74
      %p83 = scmp.eq.s32.totalorder %s26, 1
      %p84 = por %p82, %p83
      %p85 = scmp.ne.s32.totalorder %s74, %s75
      %p86 = scmp.eq.s32.totalorder %s26, 0
      %p87 = por %p85, %p86
      %p88 = scmp.ne.s32.totalorder %s74, %s75
      %p89 = scmp.eq.s32.totalorder %s27, 1
      %p90 = por %p88, %p89
      %p92 = scmp.ne.s32.totalorder %s75, %s91
      %p93 = scmp.eq.s32.totalorder %s27, 0
      %p94 = por %p92, %p93
      %s96 = sadd.s32 %s95, 1
      %p99 = scmp.eq.s32.totalorder %s21, 1
      %p100 = scmp.ne.s32.totalorder %s95, %s97
      %p101 = scmp.eq.s32.totalorder %s21, 0
      %p102 = por %p100, %p101
      %p103 = scmp.ne.s32.totalorder %s95, %s97
      %p104 = scmp.eq.s32.totalorder %s26, 1
      %p105 = por %p103, %p104
      %p106 = scmp.ne.s32.totalorder %s97, %s98
      %p107 = scmp.eq.s32.totalorder %s26, 0
      %p108 = por %p106, %p107
      %p109 = scmp.ne.s32.totalorder %s97, %s98
      %p110 = scmp.eq.s32.totalorder %s27, 1
      %p111 = por %p109, %p110
      %p113 = scmp.ne.s32.totalorder %s98, %s112
      %p114 = scmp.eq.s32.totalorder %s27, 0
      %p115 = por %p113, %p114
      %s117 = sadd.s32 %s116, 1
      %p120 = scmp.eq.s32.totalorder %s21, 1
      %p121 = scmp.ne.s32.totalorder %s116, %s118
      %p122 = scmp.eq.s32.totalorder %s21, 0
      %p123 = por %p121, %p122
      %p124 = scmp.ne.s32.totalorder %s116, %s118
      %p125 = scmp.eq.s32.totalorder %s26, 1
      %p126 = por %p124, %p125
      %p127 = scmp.ne.s32.totalorder %s118, %s119
      %p128 = scmp.eq.s32.totalorder %s26, 0
      %p129 = por %p127, %p128
      %p130 = scmp.ne.s32.totalorder %s118, %s119
      %p131 = scmp.eq.s32.totalorder %s27, 1
      %p132 = por %p130, %p131
      %p134 = scmp.ne.s32.totalorder %s119, %s133
      %p135 = scmp.eq.s32.totalorder %s27, 0
      %p136 = por %p134, %p135
      %s138 = sadd.s32 %s137, 1
      %p141 = scmp.eq.s32.totalorder %s21, 1
      %p142 = scmp.ne.s32.totalorder %s137, %s139
      %p143 = scmp.eq.s32.totalorder %s21, 0
      %p144 = por %p142, %p143
      %p145 = scmp.ne.s32.totalorder %s137, %s139
      %p146 = scmp.eq.s32.totalorder %s26, 1
      %p147 = por %p145, %p146
      %p148 = scmp.ne.s32.totalorder %s139, %s140
      %p149 = scmp.eq.s32.totalorder %s26, 0
      %p150 = por %p148, %p149
      %p151 = scmp.ne.s32.totalorder %s139, %s140
      %p152 = scmp.eq.s32.totalorder %s27, 1
      %p153 = por %p151, %p152
      %p155 = scmp.ne.s32.totalorder %s140, %s154
      %p156 = scmp.eq.s32.totalorder %s27, 0
      %p157 = por %p155, %p156
      %s159 = sadd.s32 %s158, 1
      %p162 = scmp.eq.s32.totalorder %s21, 1
      %p163 = scmp.ne.s32.totalorder %s158, %s160
      %p164 = scmp.eq.s32.totalorder %s21, 0
      %p165 = por %p163, %p164
      %p166 = scmp.ne.s32.totalorder %s158, %s160
      %p167 = scmp.eq.s32.totalorder %s26, 1
      %p168 = por %p166, %p167
      %p169 = scmp.ne.s32.totalorder %s160, %s161
      %p170 = scmp.eq.s32.totalorder %s26, 0
      %p171 = por %p169, %p170
      %p172 = scmp.ne.s32.totalorder %s160, %s161
      %p173 = scmp.eq.s32.totalorder %s27, 1
      %p174 = por %p172, %p173
      %p176 = scmp.ne.s32.totalorder %s161, %s175
      %p177 = scmp.eq.s32.totalorder %s27, 0
      %p178 = por %p176, %p177
      %s180 = sadd.s32 %s179, 1
      %p183 = scmp.eq.s32.totalorder %s21, 1
      %p184 = scmp.ne.s32.totalorder %s179, %s181
      %p185 = scmp.eq.s32.totalorder %s21, 0
      %p186 = por %p184, %p185
      %p187 = scmp.ne.s32.totalorder %s179, %s181
      %p188 = scmp.eq.s32.totalorder %s26, 1
      %p189 = por %p187, %p188
      %p190 = scmp.ne.s32.totalorder %s181, %s182
      %p191 = scmp.eq.s32.totalorder %s26, 0
      %p192 = por %p190, %p191
      %p193 = scmp.ne.s32.totalorder %s181, %s182
      %p194 = scmp.eq.s32.totalorder %s27, 1
      %p195 = por %p193, %p194
      %p197 = scmp.ne.s32.totalorder %s182, %s196
      %p198 = scmp.eq.s32.totalorder %s27, 0
      %p199 = por %p197, %p198
      %s201 = sadd.s32 %s200, 1
      %p204 = scmp.eq.s32.totalorder %s21, 1
      %p205 = scmp.ne.s32.totalorder %s200, %s202
      %p206 = scmp.eq.s32.totalorder %s21, 0
      %p207 = por %p205, %p206
      %p208 = scmp.ne.s32.totalorder %s200, %s202
      %p209 = scmp.eq.s32.totalorder %s26, 1
      %p210 = por %p208, %p209
      %p211 = scmp.ne.s32.totalorder %s202, %s203
      %p212 = scmp.eq.s32.totalorder %s26, 0
      %p213 = por %p211, %p212
      %p214 = scmp.ne.s32.totalorder %s202, %s203
      %p215 = scmp.eq.s32.totalorder %s27, 1
      %p216 = por %p214, %p215
      %p218 = scmp.ne.s32.totalorder %s203, %s217
      %p219 = scmp.eq.s32.totalorder %s27, 0
      %p220 = por %p218, %p219
      %s222 = sadd.s32 %s221, 1
      %p225 = scmp.eq.s32.totalorder %s21, 1
      %p226 = scmp.ne.s32.totalorder %s221, %s223
      %p227 = scmp.eq.s32.totalorder %s21, 0
      %p228 = por %p226, %p227
      %p229 = scmp.ne.s32.totalorder %s221, %s223
      %p230 = scmp.eq.s32.totalorder %s26, 1
      %p231 = por %p229, %p230
      %p232 = scmp.ne.s32.totalorder %s223, %s224
      %p233 = scmp.eq.s32.totalorder %s26, 0
      %p234 = por %p232, %p233
      %p235 = scmp.ne.s32.totalorder %s223, %s224
      %p236 = scmp.eq.s32.totalorder %s27, 1
      %p237 = por %p235, %p236
      %p239 = scmp.ne.s32.totalorder %s224, %s238
      %p240 = scmp.eq.s32.totalorder %s27, 0
      %p241 = por %p239, %p240
      %s242 = ssub.s32 %s28, %s40
      %s243 = ssub.s32 %s29, %s36
      %s244 = sor.u32 %s242, %s243
      %p245 = scmp.eq.s32.totalorder %s244, 0
      %s247 = sadd.s32 %s246, 1
      %s248 = scalar_select %p245, %s246, %s247
      %p251 = pneg %p245
      %p252 = scmp.eq.s32.totalorder %s21, 1
      %p253 = por %p251, %p252
      %p254 = scmp.ne.s32.totalorder %s246, %s249
      %p255 = scmp.eq.s32.totalorder %s21, 0
      %p256 = por %p254, %p255
      %p257 = scmp.ne.s32.totalorder %s246, %s249
      %p258 = scmp.eq.s32.totalorder %s26, 1
      %p259 = por %p257, %p258
      %p260 = scmp.ne.s32.totalorder %s249, %s250
      %p261 = scmp.eq.s32.totalorder %s26, 0
      %p262 = por %p260, %p261
      %p263 = scmp.ne.s32.totalorder %s249, %s250
      %p264 = scmp.eq.s32.totalorder %s27, 1
      %p265 = por %p263, %p264
      %p267 = scmp.ne.s32.totalorder %s250, %s266
      %p268 = scmp.eq.s32.totalorder %s27, 0
      %p269 = por %p267, %p268
      %p270 = scmp.le.s32.totalorder 1, %s21
      %p271 = scmp.lt.s32.totalorder %s21, 3
      %p272 = pnand %p270, %p271
      %p273 = pneg %p272
      // Predicated region
      $region9: #{tpu_custom_call.1} parent=5 // pred_check
        _
      $region10: #{tpu_custom_call.1} parent=5 // pred_check_branch
        %275 = sbr.rel (%p272) target = $region12
      $region11: #{tpu_custom_call.1} parent=5 // pred_region
        %s276 = ssub.s32 %s21, 1
        // Predicated region
        $region13: #{tpu_custom_call.1} parent=11 // pred_check
          %p277 = pneg %p108
        $region14: #{tpu_custom_call.1} parent=11 // pred_check_branch
          %279 = sbr.rel (%p277) target = $region16
        $region15: #{tpu_custom_call.1} parent=11 // pred_region
          _
        $region16: #{tpu_custom_call.1} parent=11 // pred_fallthru
          _
        // Predicated region
        $region17: #{tpu_custom_call.1} parent=11 // pred_check
          %p280 = pneg %p129
        $region18: #{tpu_custom_call.1} parent=11 // pred_check_branch
          %282 = sbr.rel (%p280) target = $region20
        $region19: #{tpu_custom_call.1} parent=11 // pred_region
          _
        $region20: #{tpu_custom_call.1} parent=11 // pred_fallthru
          _
        // Predicated region
        $region21: #{tpu_custom_call.1} parent=11 // pred_check
          %p283 = pneg %p150
        $region22: #{tpu_custom_call.1} parent=11 // pred_check_branch
          %285 = sbr.rel (%p283) target = $region24
        $region23: #{tpu_custom_call.1} parent=11 // pred_region
          _
        $region24: #{tpu_custom_call.1} parent=11 // pred_fallthru
          _
        // Predicated region
        $region25: #{tpu_custom_call.1} parent=11 // pred_check
          %p286 = pneg %p171
        $region26: #{tpu_custom_call.1} parent=11 // pred_check_branch
          %288 = sbr.rel (%p286) target = $region28
        $region27: #{tpu_custom_call.1} parent=11 // pred_region
          _
        $region28: #{tpu_custom_call.1} parent=11 // pred_fallthru
          _
        // Predicated region
        $region29: #{tpu_custom_call.1} parent=11 // pred_check
          %p289 = pneg %p192
        $region30: #{tpu_custom_call.1} parent=11 // pred_check_branch
          %291 = sbr.rel (%p289) target = $region32
        $region31: #{tpu_custom_call.1} parent=11 // pred_region
          _
        $region32: #{tpu_custom_call.1} parent=11 // pred_fallthru
          _
        // Predicated region
        $region33: #{tpu_custom_call.1} parent=11 // pred_check
          %p292 = pneg %p213
        $region34: #{tpu_custom_call.1} parent=11 // pred_check_branch
          %294 = sbr.rel (%p292) target = $region36
        $region35: #{tpu_custom_call.1} parent=11 // pred_region
          _
        $region36: #{tpu_custom_call.1} parent=11 // pred_fallthru
          _
        // Predicated region
        $region37: #{tpu_custom_call.1} parent=11 // pred_check
          %p295 = pneg %p234
        $region38: #{tpu_custom_call.1} parent=11 // pred_check_branch
          %297 = sbr.rel (%p295) target = $region40
        $region39: #{tpu_custom_call.1} parent=11 // pred_region
          _
        $region40: #{tpu_custom_call.1} parent=11 // pred_fallthru
          _
      $region12: #{tpu_custom_call.1} parent=5 // pred_fallthru
        _
      %p298 = scmp.lt.s32.totalorder %s21, 2
      // Predicated region
      $region41: #{tpu_custom_call.1} parent=5 // pred_check
        %p299 = pneg %p298
      $region42: #{tpu_custom_call.1} parent=5 // pred_check_branch
        %301 = sbr.rel (%p299) target = $region44
      $region43: #{tpu_custom_call.1} parent=5 // pred_region
        // Predicated region
        $region45: #{tpu_custom_call.1} parent=43 // pred_check
          %p302 = pneg %p55
        $region46: #{tpu_custom_call.1} parent=43 // pred_check_branch
          %304 = sbr.rel (%p302) target = $region48
        $region47: #{tpu_custom_call.1} parent=43 // pred_region
          %p305 = scmp.lt.s32.totalorder %s28, 1
          %s306 = scalar_select %p305, %s28, 1
          %p307 = scmp.lt.s32.totalorder %s29, 0
          %s308 = scalar_select %p307, %s29, 0
          %s309 = sadd.s32 %s308, %s306
          %s310 = smul.addr %s309, 8
          %s311 = scalar_lea.vmem %s0, %s310
        $region48: #{tpu_custom_call.1} parent=43 // pred_fallthru
          _
        // Predicated region
        $region49: #{tpu_custom_call.1} parent=43 // pred_check
          %p312 = pneg %p81
        $region50: #{tpu_custom_call.1} parent=43 // pred_check_branch
          %314 = sbr.rel (%p312) target = $region52
        $region51: #{tpu_custom_call.1} parent=43 // pred_region
          %s315 = sand.u32 %s71, 1
          %s316 = scalar_lea.sflag [#allocation5], %s315
          %s317 = sand.u32 %s71, 1
          %s318 = smul.addr %s317, 4
          %s319 = scalar_lea.vmem [#allocation4], %s318
          %s321 = ssub.s32 64, 64
          %322 = vsyncadd %s316, %s321
          %s323 = smul.addr %s28, 64
          %s324 = scalar_lea.hbm %s1, %s323
          %s326 = sshll.u32 %s319, 4
          %s327 = int_to_ptr.vmem [resolvable:$true] %s326
          %329 = dma.hbm_to_vmem [thread:$0]  %s324, 64, %s327, %s316
        $region52: #{tpu_custom_call.1} parent=43 // pred_fallthru
          _
      $region44: #{tpu_custom_call.1} parent=5 // pred_fallthru
        _
      %p330 = scmp.le.s32.totalorder 1, %s21
      %p331 = scmp.lt.s32.totalorder %s21, 3
      %p332 = pnand %p330, %p331
      %p333 = pneg %p332
      // Predicated region
      $region53: #{tpu_custom_call.1} parent=5 // pred_check
        _
      $region54: #{tpu_custom_call.1} parent=5 // pred_check_branch
        %335 = sbr.rel (%p332) target = $region56
      $region55: #{tpu_custom_call.1} parent=5 // pred_region
        %s336 = ssub.s32 %s21, 1
        %s337 = sand.u32 %s74, 1
        %s338 = scalar_lea.sflag [#allocation5], %s337
        %s339 = sand.u32 %s74, 1
        %s340 = smul.addr %s339, 4
        %s341 = scalar_lea.vmem [#allocation4], %s340
        // Predicated region
        $region57: #{tpu_custom_call.1} parent=55 // pred_check
          %p342 = pneg %p87
        $region58: #{tpu_custom_call.1} parent=55 // pred_check_branch
          %344 = sbr.rel (%p342) target = $region60
        $region59: #{tpu_custom_call.1} parent=55 // pred_region
          %345 = dma.done %s338, 64
        $region60: #{tpu_custom_call.1} parent=55 // pred_fallthru
          _
        %p346 = scmp.lt.s32.totalorder %s30, 1
        %s347 = scalar_select %p346, %s30, 1
        %p348 = scmp.lt.s32.totalorder %s31, 0
        %s349 = scalar_select %p348, %s31, 0
        %s350 = sadd.s32 %s349, %s347
        %s351 = smul.addr %s350, 8
        %s352 = scalar_lea.vmem %s0, %s351
        %p353 = pneg %p61
        %p354 = pneg %p58
        %s355 = sand.u32 %s74, 1
        %s356 = scalar_lea.sflag [#allocation5], %s355
        %s357 = sand.u32 %s74, 1
        %s358 = smul.addr %s357, 4
        %s359 = scalar_lea.vmem [#allocation4], %s358
        %p360 = pneg %p87
        %p361 = pneg %p84
        %p362 = pneg %p108
        %p363 = pneg %p105
        %p364 = pneg %p129
        %p365 = pneg %p126
        %p366 = pneg %p150
        %p367 = pneg %p147
        %p368 = pneg %p171
        %p369 = pneg %p168
        %p370 = pneg %p192
        %p371 = pneg %p189
        %p372 = pneg %p213
        %p373 = pneg %p210
        %p374 = pneg %p234
        %p375 = pneg %p231
        %p376 = pneg %p262
        %p377 = pneg %p259
        %s378 = sand.u32 %s249, 1
        %s379 = scalar_lea.sflag [#allocation6], %s378
        %s380 = sand.u32 %s249, 1
        %s381 = smul.addr %s380, 8
        %s382 = scalar_lea.vmem [#allocation7], %s381
        %p383 = scmp.lt.s32.totalorder %s30, 1
        %s384 = scalar_select %p383, %s30, 1
        %p385 = scmp.lt.s32.totalorder %s31, 0
        %s386 = scalar_select %p385, %s31, 0
        %s387 = sadd.s32 %s386, %s384
        %s388 = smul.addr %s387, 8
        %s389 = scalar_lea.vmem %s0, %s388
        %p391 = scmp.eq.s32.totalorder %s31, 0
        // Predicated region
        $region61: #{tpu_custom_call.1} parent=55 // pred_check
          %p392 = pneg %p391
        $region62: #{tpu_custom_call.1} parent=55 // pred_check_branch
          %394 = sbr.rel (%p392) target = $region64
        $region63: #{tpu_custom_call.1} parent=55 // pred_region
          %v395 = vld [vmem:[%s341] sm:$0xf]
          %v396 = vld [vmem:[%s3] sm:$0xf]
          %v397 = vld [vmem:[%s3 + $0x4] sm:$0xf]
          %v398 = vld [vmem:[%s3 + $0x8] sm:$0xf]
          %v399 = vld [vmem:[%s3 + $0xc] sm:$0xf]
          %v404 = vunpack.c.l.b16 %v396
          %v405 = vunpack.c.l.b16 %v397
          %v406 = vunpack.c.l.b16 %v398
          %v407 = vunpack.c.l.b16 %v399
          %v408 = vpack.c.b16 %v405, %v404
          %v409 = vpack.c.b16 %v407, %v406
          %vm412 = vcmask 261120
          %v414 = vsel %vm412, %v395, 0
          %416 = vmatprep.subr.bf16.mxu0 0
          %417 = vmatpush1.bf16.msra.mxu0 0
          %418 = vmatprep.subr.bf16.mxu0 0
          %419 = vmatpush1.bf16.msra.mxu0 0
          %420 = vmatprep.subr.bf16.mxu0 0
          %421 = vmatpush1.bf16.msra.mxu0 0
          %422 = vmatprep.subr.bf16.mxu0 0
          %423 = vmatpush1.bf16.msra.mxu0 0
          %424 = vmatprep.subr.bf16.mxu0 0
          %425 = vmatpush1.bf16.msra.mxu0 0
          %426 = vmatprep.subr.bf16.mxu0 0
          %427 = vmatpush1.bf16.msra.mxu0 0
          %428 = vmatprep.subr.bf16.mxu0 0
          %429 = vmatpush1.bf16.msra.mxu0 %v409
          %430 = vmatprep.subr.bf16.mxu0 0
          %431 = vmatpush1.bf16.msra.mxu0 %v408
          %432 = vmatprep.subr.bf16.mxu0 0
          %433 = vmatpush2.bf16.msra.mxu0 0
          %434 = vmatprep.subr.bf16.mxu0 0
          %435 = vmatpush2.bf16.msra.mxu0 0
          %436 = vmatprep.subr.bf16.mxu0 0
          %437 = vmatpush2.bf16.msra.mxu0 0
          %438 = vmatprep.subr.bf16.mxu0 0
          %439 = vmatpush2.bf16.msra.mxu0 0
          %440 = vmatprep.subr.bf16.mxu0 0
          %441 = vmatpush2.bf16.msra.mxu0 0
          %442 = vmatprep.subr.bf16.mxu0 0
          %443 = vmatpush2.bf16.msra.mxu0 0
          %444 = vmatprep.subr.bf16.mxu0 0
          %445 = vmatpush2.bf16.msra.mxu0 0
          %446 = vmatprep.subr.bf16.mxu0 0
          %447 = vmatpush2.bf16.msra.mxu0 0
          %448 = vmatprep.mubr.bf16.mxu0 0
          %449 = vmatmul.mubr.bf16.gmra.mxu0 %v414
          %v450 = vpop.f32.mrf.mxu0
          %v451 = vadd.f32 0.0, %v450
          %v452 = vpop.f32.mrf.mxu0
          %v453 = vpop.f32.mrf.mxu0
          %v454 = vpop.f32.mrf.mxu0
          %455 = vdwg.mxu0
          %v456 = vpack.c.bf16 %v451, %v451
          %vm457 = vcmask 125952
          %458 = vst.msk [vmem:[#allocation2] sm:$0xf] %vm457, %v456
          %v460 = vunpack.c.l.b16 %v456
          %v461 = vpack.c.b16 %v460, %v460
          %462 = vrot.lane.b32.xlu0 %v461, 64
          %v463 = vpop.permute.xlu0 %462
          %465 = vst.msk [vmem:[#allocation3] sm:$0xf] %vm457, %v463
          %466 = vrot.lane.b32.xlu0 %v461, 112
          %v467 = vpop.permute.xlu0 %466
          %s469 = scalar_lea.vmem [#allocation2], 4
          %470 = vst.msk [vmem:[%s469] sm:$0xf] %vm457, %v467
          %471 = vrot.lane.b32.xlu0 %v461, 48
          %v472 = vpop.permute.xlu0 %471
          %s474 = scalar_lea.vmem [#allocation3], 4
          %475 = vst.msk [vmem:[%s474] sm:$0xf] %vm457, %v472
          %476 = vrot.lane.b32.xlu0 %v461, 96
          %v477 = vpop.permute.xlu0 %476
          %s479 = scalar_lea.vmem [#allocation2], 8
          %480 = vst.msk [vmem:[%s479] sm:$0xf] %vm457, %v477
          %481 = vrot.lane.b32.xlu0 %v461, 32
          %v482 = vpop.permute.xlu0 %481
          %s484 = scalar_lea.vmem [#allocation3], 8
          %485 = vst.msk [vmem:[%s484] sm:$0xf] %vm457, %v482
          %486 = vrot.lane.b32.xlu0 %v461, 80
          %v487 = vpop.permute.xlu0 %486
          %s489 = scalar_lea.vmem [#allocation2], 12
          %490 = vst.msk [vmem:[%s489] sm:$0xf] %vm457, %v487
          %491 = vrot.lane.b32.xlu0 %v461, 16
          %v492 = vpop.permute.xlu0 %491
          %s494 = scalar_lea.vmem [#allocation3], 12
          %495 = vst.msk [vmem:[%s494] sm:$0xf] %vm457, %v492
        $region64: #{tpu_custom_call.1} parent=55 // pred_fallthru
          _
        %v496 = vld [vmem:[%s389] sm:$0xff]
        %v497 = vpack.c.bf16 %v496, %v496
        %v498 = vld [vmem:[%s2] sm:$0xf]
        %v499 = vld [vmem:[%s2 + $0x4] sm:$0xf]
        %v500 = vld [vmem:[%s2 + $0x8] sm:$0xf]
        %v501 = vld [vmem:[%s2 + $0xc] sm:$0xf]
        %v506 = vunpack.c.l.b16 %v498
        %v507 = vunpack.c.l.b16 %v499
        %v508 = vunpack.c.l.b16 %v500
        %v509 = vunpack.c.l.b16 %v501
        %v510 = vpack.c.b16 %v507, %v506
        %v511 = vpack.c.b16 %v509, %v508
        %vm514 = vcmask 261120
        %v516 = vsel %vm514, %v497, 0
        %518 = vmatprep.subr.bf16.mxu0 0
        %519 = vmatpush1.bf16.msra.mxu0 0
        %520 = vmatprep.subr.bf16.mxu0 0
        %521 = vmatpush1.bf16.msra.mxu0 0
        %522 = vmatprep.subr.bf16.mxu0 0
        %523 = vmatpush1.bf16.msra.mxu0 0
        %524 = vmatprep.subr.bf16.mxu0 0
        %525 = vmatpush1.bf16.msra.mxu0 0
        %526 = vmatprep.subr.bf16.mxu0 0
        %527 = vmatpush1.bf16.msra.mxu0 0
        %528 = vmatprep.subr.bf16.mxu0 0
        %529 = vmatpush1.bf16.msra.mxu0 0
        %530 = vmatprep.subr.bf16.mxu0 0
        %531 = vmatpush1.bf16.msra.mxu0 %v511
        %532 = vmatprep.subr.bf16.mxu0 0
        %533 = vmatpush1.bf16.msra.mxu0 %v510
        %534 = vmatprep.subr.bf16.mxu0 0
        %535 = vmatpush2.bf16.msra.mxu0 0
        %536 = vmatprep.subr.bf16.mxu0 0
        %537 = vmatpush2.bf16.msra.mxu0 0
        %538 = vmatprep.subr.bf16.mxu0 0
        %539 = vmatpush2.bf16.msra.mxu0 0
        %540 = vmatprep.subr.bf16.mxu0 0
        %541 = vmatpush2.bf16.msra.mxu0 0
        %542 = vmatprep.subr.bf16.mxu0 0
        %543 = vmatpush2.bf16.msra.mxu0 0
        %544 = vmatprep.subr.bf16.mxu0 0
        %545 = vmatpush2.bf16.msra.mxu0 0
        %546 = vmatprep.subr.bf16.mxu0 0
        %547 = vmatpush2.bf16.msra.mxu0 0
        %548 = vmatprep.subr.bf16.mxu0 0
        %549 = vmatpush2.bf16.msra.mxu0 0
        %550 = vmatprep.mubr.bf16.mxu0 0
        %551 = vmatmul.mubr.bf16.gmra.mxu0 %v516
        %v552 = vpop.f32.mrf.mxu0
        %v553 = vadd.f32 0.0, %v552
        %v554 = vpop.f32.mrf.mxu0
        %v555 = vpop.f32.mrf.mxu0
        %v556 = vpop.f32.mrf.mxu0
        %557 = vdwg.mxu0
        %v558 = vld [vmem:[%s4] sm:$0x1]
        %v560 = vlaneseq
        %v561 = vshrl.u32 %v560, 7
        %v562 = vsub.s32 0, %v561
        %v563 = vrot.slane %v558, %v562
        %564 = vrot.lane.b32.xlu0 %v563, 64
        %v565 = vpop.permute.xlu0 %564
        %v567 = vadd.f32 %v553, %v565
        %v568 = vxor.u32 %v567, 2147483648
        %v569 = vmul.f32 %v568, 1.442695
        %v570 = vpow.pop %v569
        %v571 = vadd.f32 %v570, 1.0
        %v572 = vrcp.pop %v571
        %v573 = vmul.f32 1.0, %v572
        %v574 = vpack.c.bf16 %v553, %v553
        %v575 = vld [vmem:[#allocation2] sm:$0xf]
        %vm576 = vcmask 130048
        %v578 = vsel %vm576, %v574, 0
        %v581 = vsel %vm576, %v575, 0
        %583 = vmatprep.subr.bf16.mxu0 0
        %584 = vmatpush1.bf16.xpose.msra.mxu0 0
        %585 = vmatprep.subr.bf16.mxu0 0
        %586 = vmatpush1.bf16.xpose.msra.mxu0 0
        %587 = vmatprep.subr.bf16.mxu0 0
        %588 = vmatpush1.bf16.xpose.msra.mxu0 0
        %589 = vmatprep.subr.bf16.mxu0 0
        %590 = vmatpush1.bf16.xpose.msra.mxu0 0
        %591 = vmatprep.subr.bf16.mxu0 0
        %592 = vmatpush1.bf16.xpose.msra.mxu0 0
        %593 = vmatprep.subr.bf16.mxu0 0
        %594 = vmatpush1.bf16.xpose.msra.mxu0 0
        %595 = vmatprep.subr.bf16.mxu0 0
        %596 = vmatpush1.bf16.xpose.msra.mxu0 0
        %597 = vmatprep.subr.bf16.mxu0 0
        %598 = vmatpush1.bf16.xpose.msra.mxu0 %v581
        %599 = vmatprep.subr.bf16.mxu0 0
        %600 = vmatpush2.bf16.xpose.msra.mxu0 0
        %601 = vmatprep.subr.bf16.mxu0 0
        %602 = vmatpush2.bf16.xpose.msra.mxu0 0
        %603 = vmatprep.subr.bf16.mxu0 0
        %604 = vmatpush2.bf16.xpose.msra.mxu0 0
        %605 = vmatprep.subr.bf16.mxu0 0
        %606 = vmatpush2.bf16.xpose.msra.mxu0 0
        %607 = vmatprep.subr.bf16.mxu0 0
        %608 = vmatpush2.bf16.xpose.msra.mxu0 0
        %609 = vmatprep.subr.bf16.mxu0 0
        %610 = vmatpush2.bf16.xpose.msra.mxu0 0
        %611 = vmatprep.subr.bf16.mxu0 0
        %612 = vmatpush2.bf16.xpose.msra.mxu0 0
        %613 = vmatprep.subr.bf16.mxu0 0
        %614 = vmatpush2.bf16.xpose.msra.mxu0 0
        %615 = vmatprep.mubr.bf16.mxu0 0
        %616 = vmatmul.mubr.bf16.gmra.mxu0 %v578
        %v617 = vpop.f32.mrf.mxu0
        %v618 = vadd.f32 0.0, %v617
        %v619 = vpop.f32.mrf.mxu0
        %v620 = vpop.f32.mrf.mxu0
        %v621 = vpop.f32.mrf.mxu0
        %622 = vdwg.mxu0
        %vm623 = vcmask 64512
        %v624 = vsel %vm623, %v618, -inf
        %625 = vmax.xlane.f32.xlu0 %v624
        %v626 = vpop.xlane.xlu0 %625
        %v627 = vsub.f32 %v618, %v626
        %v628 = vmul.f32 %v627, 1.442695
        %v629 = vpow.pop %v628
        %v630 = vsel %vm623, %v629, 0.0
        %631 = vadd.xlane.f32.xlu0 %v630
        %v632 = vpop.xlane.xlu0 %631
        %v633 = vpack.c.bf16 %v629, %v629
        %v634 = vld [vmem:[#allocation3] sm:$0xf]
        %v636 = vsel %vm623, %v633, 0
        %vm638 = vcmask 1043456
        %v640 = vsel %vm638, %v634, 0
        %642 = vmatprep.subr.bf16.mxu0 0
        %643 = vmatpush1.bf16.msra.mxu0 0
        %644 = vmatprep.subr.bf16.mxu0 0
        %645 = vmatpush1.bf16.msra.mxu0 0
        %646 = vmatprep.subr.bf16.mxu0 0
        %647 = vmatpush1.bf16.msra.mxu0 0
        %648 = vmatprep.subr.bf16.mxu0 0
        %649 = vmatpush1.bf16.msra.mxu0 0
        %650 = vmatprep.subr.bf16.mxu0 0
        %651 = vmatpush1.bf16.msra.mxu0 0
        %652 = vmatprep.subr.bf16.mxu0 0
        %653 = vmatpush1.bf16.msra.mxu0 0
        %654 = vmatprep.subr.bf16.mxu0 0
        %655 = vmatpush1.bf16.msra.mxu0 0
        %656 = vmatprep.subr.bf16.mxu0 0
        %657 = vmatpush1.bf16.msra.mxu0 %v640
        %658 = vmatprep.subr.bf16.mxu0 0
        %659 = vmatpush2.bf16.msra.mxu0 0
        %660 = vmatprep.subr.bf16.mxu0 0
        %661 = vmatpush2.bf16.msra.mxu0 0
        %662 = vmatprep.subr.bf16.mxu0 0
        %663 = vmatpush2.bf16.msra.mxu0 0
        %664 = vmatprep.subr.bf16.mxu0 0
        %665 = vmatpush2.bf16.msra.mxu0 0
        %666 = vmatprep.subr.bf16.mxu0 0
        %667 = vmatpush2.bf16.msra.mxu0 0
        %668 = vmatprep.subr.bf16.mxu0 0
        %669 = vmatpush2.bf16.msra.mxu0 0
        %670 = vmatprep.subr.bf16.mxu0 0
        %671 = vmatpush2.bf16.msra.mxu0 0
        %672 = vmatprep.subr.bf16.mxu0 0
        %673 = vmatpush2.bf16.msra.mxu0 0
        %674 = vmatprep.mubr.bf16.mxu0 0
        %675 = vmatmul.mubr.bf16.gmra.mxu0 %v636
        %v676 = vpop.f32.mrf.mxu0
        %v677 = vadd.f32 0.0, %v676
        %v678 = vpop.f32.mrf.mxu0
        %v679 = vpop.f32.mrf.mxu0
        %v680 = vpop.f32.mrf.mxu0
        %681 = vdwg.mxu0
        %v682 = vrcp.pop %v632
        %v683 = vmul.f32 %v677, %v682
        %s684 = scalar_lea.vmem [#allocation2], 4
        %v685 = vld [vmem:[%s684] sm:$0xf]
        %687 = vrot.lane.b32.xlu0 %v574, 112
        %v688 = vpop.permute.xlu0 %687
        %v690 = vsel %vm576, %v688, 0
        %v693 = vsel %vm576, %v685, 0
        %695 = vmatprep.subr.bf16.mxu0 0
        %696 = vmatpush1.bf16.xpose.msra.mxu0 0
        %697 = vmatprep.subr.bf16.mxu0 0
        %698 = vmatpush1.bf16.xpose.msra.mxu0 0
        %699 = vmatprep.subr.bf16.mxu0 0
        %700 = vmatpush1.bf16.xpose.msra.mxu0 0
        %701 = vmatprep.subr.bf16.mxu0 0
        %702 = vmatpush1.bf16.xpose.msra.mxu0 0
        %703 = vmatprep.subr.bf16.mxu0 0
        %704 = vmatpush1.bf16.xpose.msra.mxu0 0
        %705 = vmatprep.subr.bf16.mxu0 0
        %706 = vmatpush1.bf16.xpose.msra.mxu0 0
        %707 = vmatprep.subr.bf16.mxu0 0
        %708 = vmatpush1.bf16.xpose.msra.mxu0 0
        %709 = vmatprep.subr.bf16.mxu0 0
        %710 = vmatpush1.bf16.xpose.msra.mxu0 %v693
        %711 = vmatprep.subr.bf16.mxu0 0
        %712 = vmatpush2.bf16.xpose.msra.mxu0 0
        %713 = vmatprep.subr.bf16.mxu0 0
        %714 = vmatpush2.bf16.xpose.msra.mxu0 0
        %715 = vmatprep.subr.bf16.mxu0 0
        %716 = vmatpush2.bf16.xpose.msra.mxu0 0
        %717 = vmatprep.subr.bf16.mxu0 0
        %718 = vmatpush2.bf16.xpose.msra.mxu0 0
        %719 = vmatprep.subr.bf16.mxu0 0
        %720 = vmatpush2.bf16.xpose.msra.mxu0 0
        %721 = vmatprep.subr.bf16.mxu0 0
        %722 = vmatpush2.bf16.xpose.msra.mxu0 0
        %723 = vmatprep.subr.bf16.mxu0 0
        %724 = vmatpush2.bf16.xpose.msra.mxu0 0
        %725 = vmatprep.subr.bf16.mxu0 0
        %726 = vmatpush2.bf16.xpose.msra.mxu0 0
        %727 = vmatprep.mubr.bf16.mxu0 0
        %728 = vmatmul.mubr.bf16.gmra.mxu0 %v690
        %v729 = vpop.f32.mrf.mxu0
        %v730 = vadd.f32 0.0, %v729
        %v731 = vpop.f32.mrf.mxu0
        %v732 = vpop.f32.mrf.mxu0
        %v733 = vpop.f32.mrf.mxu0
        %734 = vdwg.mxu0
        %v735 = vsel %vm623, %v730, -inf
        %736 = vmax.xlane.f32.xlu0 %v735
        %v737 = vpop.xlane.xlu0 %736
        %v738 = vsub.f32 %v730, %v737
        %v739 = vmul.f32 %v738, 1.442695
        %v740 = vpow.pop %v739
        %v741 = vsel %vm623, %v740, 0.0
        %742 = vadd.xlane.f32.xlu0 %v741
        %v743 = vpop.xlane.xlu0 %742
        %v744 = vpack.c.bf16 %v740, %v740
        %s745 = scalar_lea.vmem [#allocation3], 4
        %v746 = vld [vmem:[%s745] sm:$0xf]
        %v748 = vsel %vm623, %v744, 0
        %v751 = vsel %vm638, %v746, 0
        %753 = vmatprep.subr.bf16.mxu0 0
        %754 = vmatpush1.bf16.msra.mxu0 0
        %755 = vmatprep.subr.bf16.mxu0 0
        %756 = vmatpush1.bf16.msra.mxu0 0
        %757 = vmatprep.subr.bf16.mxu0 0
        %758 = vmatpush1.bf16.msra.mxu0 0
        %759 = vmatprep.subr.bf16.mxu0 0
        %760 = vmatpush1.bf16.msra.mxu0 0
        %761 = vmatprep.subr.bf16.mxu0 0
        %762 = vmatpush1.bf16.msra.mxu0 0
        %763 = vmatprep.subr.bf16.mxu0 0
        %764 = vmatpush1.bf16.msra.mxu0 0
        %765 = vmatprep.subr.bf16.mxu0 0
        %766 = vmatpush1.bf16.msra.mxu0 0
        %767 = vmatprep.subr.bf16.mxu0 0
        %768 = vmatpush1.bf16.msra.mxu0 %v751
        %769 = vmatprep.subr.bf16.mxu0 0
        %770 = vmatpush2.bf16.msra.mxu0 0
        %771 = vmatprep.subr.bf16.mxu0 0
        %772 = vmatpush2.bf16.msra.mxu0 0
        %773 = vmatprep.subr.bf16.mxu0 0
        %774 = vmatpush2.bf16.msra.mxu0 0
        %775 = vmatprep.subr.bf16.mxu0 0
        %776 = vmatpush2.bf16.msra.mxu0 0
        %777 = vmatprep.subr.bf16.mxu0 0
        %778 = vmatpush2.bf16.msra.mxu0 0
        %779 = vmatprep.subr.bf16.mxu0 0
        %780 = vmatpush2.bf16.msra.mxu0 0
        %781 = vmatprep.subr.bf16.mxu0 0
        %782 = vmatpush2.bf16.msra.mxu0 0
        %783 = vmatprep.subr.bf16.mxu0 0
        %784 = vmatpush2.bf16.msra.mxu0 0
        %785 = vmatprep.mubr.bf16.mxu0 0
        %786 = vmatmul.mubr.bf16.gmra.mxu0 %v748
        %v787 = vpop.f32.mrf.mxu0
        %v788 = vadd.f32 0.0, %v787
        %v789 = vpop.f32.mrf.mxu0
        %v790 = vpop.f32.mrf.mxu0
        %v791 = vpop.f32.mrf.mxu0
        %792 = vdwg.mxu0
        %v793 = vrcp.pop %v743
        %v794 = vmul.f32 %v788, %v793
        %s795 = scalar_lea.vmem [#allocation2], 8
        %v796 = vld [vmem:[%s795] sm:$0xf]
        %797 = vrot.lane.b32.xlu0 %v574, 96
        %v798 = vpop.permute.xlu0 %797
        %v800 = vsel %vm576, %v798, 0
        %v803 = vsel %vm576, %v796, 0
        %805 = vmatprep.subr.bf16.mxu0 0
        %806 = vmatpush1.bf16.xpose.msra.mxu0 0
        %807 = vmatprep.subr.bf16.mxu0 0
        %808 = vmatpush1.bf16.xpose.msra.mxu0 0
        %809 = vmatprep.subr.bf16.mxu0 0
        %810 = vmatpush1.bf16.xpose.msra.mxu0 0
        %811 = vmatprep.subr.bf16.mxu0 0
        %812 = vmatpush1.bf16.xpose.msra.mxu0 0
        %813 = vmatprep.subr.bf16.mxu0 0
        %814 = vmatpush1.bf16.xpose.msra.mxu0 0
        %815 = vmatprep.subr.bf16.mxu0 0
        %816 = vmatpush1.bf16.xpose.msra.mxu0 0
        %817 = vmatprep.subr.bf16.mxu0 0
        %818 = vmatpush1.bf16.xpose.msra.mxu0 0
        %819 = vmatprep.subr.bf16.mxu0 0
        %820 = vmatpush1.bf16.xpose.msra.mxu0 %v803
        %821 = vmatprep.subr.bf16.mxu0 0
        %822 = vmatpush2.bf16.xpose.msra.mxu0 0
        %823 = vmatprep.subr.bf16.mxu0 0
        %824 = vmatpush2.bf16.xpose.msra.mxu0 0
        %825 = vmatprep.subr.bf16.mxu0 0
        %826 = vmatpush2.bf16.xpose.msra.mxu0 0
        %827 = vmatprep.subr.bf16.mxu0 0
        %828 = vmatpush2.bf16.xpose.msra.mxu0 0
        %829 = vmatprep.subr.bf16.mxu0 0
        %830 = vmatpush2.bf16.xpose.msra.mxu0 0
        %831 = vmatprep.subr.bf16.mxu0 0
        %832 = vmatpush2.bf16.xpose.msra.mxu0 0
        %833 = vmatprep.subr.bf16.mxu0 0
        %834 = vmatpush2.bf16.xpose.msra.mxu0 0
        %835 = vmatprep.subr.bf16.mxu0 0
        %836 = vmatpush2.bf16.xpose.msra.mxu0 0
        %837 = vmatprep.mubr.bf16.mxu0 0
        %838 = vmatmul.mubr.bf16.gmra.mxu0 %v800
        %v839 = vpop.f32.mrf.mxu0
        %v840 = vadd.f32 0.0, %v839
        %v841 = vpop.f32.mrf.mxu0
        %v842 = vpop.f32.mrf.mxu0
        %v843 = vpop.f32.mrf.mxu0
        %844 = vdwg.mxu0
        %v845 = vsel %vm623, %v840, -inf
        %846 = vmax.xlane.f32.xlu0 %v845
        %v847 = vpop.xlane.xlu0 %846
        %v848 = vsub.f32 %v840, %v847
        %v849 = vmul.f32 %v848, 1.442695
        %v850 = vpow.pop %v849
        %v851 = vsel %vm623, %v850, 0.0
        %852 = vadd.xlane.f32.xlu0 %v851
        %v853 = vpop.xlane.xlu0 %852
        %v854 = vpack.c.bf16 %v850, %v850
        %s855 = scalar_lea.vmem [#allocation3], 8
        %v856 = vld [vmem:[%s855] sm:$0xf]
        %v858 = vsel %vm623, %v854, 0
        %v861 = vsel %vm638, %v856, 0
        %863 = vmatprep.subr.bf16.mxu0 0
        %864 = vmatpush1.bf16.msra.mxu0 0
        %865 = vmatprep.subr.bf16.mxu0 0
        %866 = vmatpush1.bf16.msra.mxu0 0
        %867 = vmatprep.subr.bf16.mxu0 0
        %868 = vmatpush1.bf16.msra.mxu0 0
        %869 = vmatprep.subr.bf16.mxu0 0
        %870 = vmatpush1.bf16.msra.mxu0 0
        %871 = vmatprep.subr.bf16.mxu0 0
        %872 = vmatpush1.bf16.msra.mxu0 0
        %873 = vmatprep.subr.bf16.mxu0 0
        %874 = vmatpush1.bf16.msra.mxu0 0
        %875 = vmatprep.subr.bf16.mxu0 0
        %876 = vmatpush1.bf16.msra.mxu0 0
        %877 = vmatprep.subr.bf16.mxu0 0
        %878 = vmatpush1.bf16.msra.mxu0 %v861
        %879 = vmatprep.subr.bf16.mxu0 0
        %880 = vmatpush2.bf16.msra.mxu0 0
        %881 = vmatprep.subr.bf16.mxu0 0
        %882 = vmatpush2.bf16.msra.mxu0 0
        %883 = vmatprep.subr.bf16.mxu0 0
        %884 = vmatpush2.bf16.msra.mxu0 0
        %885 = vmatprep.subr.bf16.mxu0 0
        %886 = vmatpush2.bf16.msra.mxu0 0
        %887 = vmatprep.subr.bf16.mxu0 0
        %888 = vmatpush2.bf16.msra.mxu0 0
        %889 = vmatprep.subr.bf16.mxu0 0
        %890 = vmatpush2.bf16.msra.mxu0 0
        %891 = vmatprep.subr.bf16.mxu0 0
        %892 = vmatpush2.bf16.msra.mxu0 0
        %893 = vmatprep.subr.bf16.mxu0 0
        %894 = vmatpush2.bf16.msra.mxu0 0
        %895 = vmatprep.mubr.bf16.mxu0 0
        %896 = vmatmul.mubr.bf16.gmra.mxu0 %v858
        %v897 = vpop.f32.mrf.mxu0
        %v898 = vadd.f32 0.0, %v897
        %v899 = vpop.f32.mrf.mxu0
        %v900 = vpop.f32.mrf.mxu0
        %v901 = vpop.f32.mrf.mxu0
        %902 = vdwg.mxu0
        %v903 = vrcp.pop %v853
        %v904 = vmul.f32 %v898, %v903
        %s905 = scalar_lea.vmem [#allocation2], 12
        %v906 = vld [vmem:[%s905] sm:$0xf]
        %907 = vrot.lane.b32.xlu0 %v574, 80
        %v908 = vpop.permute.xlu0 %907
        %v910 = vsel %vm576, %v908, 0
        %v913 = vsel %vm576, %v906, 0
        %915 = vmatprep.subr.bf16.mxu0 0
        %916 = vmatpush1.bf16.xpose.msra.mxu0 0
        %917 = vmatprep.subr.bf16.mxu0 0
        %918 = vmatpush1.bf16.xpose.msra.mxu0 0
        %919 = vmatprep.subr.bf16.mxu0 0
        %920 = vmatpush1.bf16.xpose.msra.mxu0 0
        %921 = vmatprep.subr.bf16.mxu0 0
        %922 = vmatpush1.bf16.xpose.msra.mxu0 0
        %923 = vmatprep.subr.bf16.mxu0 0
        %924 = vmatpush1.bf16.xpose.msra.mxu0 0
        %925 = vmatprep.subr.bf16.mxu0 0
        %926 = vmatpush1.bf16.xpose.msra.mxu0 0
        %927 = vmatprep.subr.bf16.mxu0 0
        %928 = vmatpush1.bf16.xpose.msra.mxu0 0
        %929 = vmatprep.subr.bf16.mxu0 0
        %930 = vmatpush1.bf16.xpose.msra.mxu0 %v913
        %931 = vmatprep.subr.bf16.mxu0 0
        %932 = vmatpush2.bf16.xpose.msra.mxu0 0
        %933 = vmatprep.subr.bf16.mxu0 0
        %934 = vmatpush2.bf16.xpose.msra.mxu0 0
        %935 = vmatprep.subr.bf16.mxu0 0
        %936 = vmatpush2.bf16.xpose.msra.mxu0 0
        %937 = vmatprep.subr.bf16.mxu0 0
        %938 = vmatpush2.bf16.xpose.msra.mxu0 0
        %939 = vmatprep.subr.bf16.mxu0 0
        %940 = vmatpush2.bf16.xpose.msra.mxu0 0
        %941 = vmatprep.subr.bf16.mxu0 0
        %942 = vmatpush2.bf16.xpose.msra.mxu0 0
        %943 = vmatprep.subr.bf16.mxu0 0
        %944 = vmatpush2.bf16.xpose.msra.mxu0 0
        %945 = vmatprep.subr.bf16.mxu0 0
        %946 = vmatpush2.bf16.xpose.msra.mxu0 0
        %947 = vmatprep.mubr.bf16.mxu0 0
        %948 = vmatmul.mubr.bf16.gmra.mxu0 %v910
        %v949 = vpop.f32.mrf.mxu0
        %v950 = vadd.f32 0.0, %v949
        %v951 = vpop.f32.mrf.mxu0
        %v952 = vpop.f32.mrf.mxu0
        %v953 = vpop.f32.mrf.mxu0
        %954 = vdwg.mxu0
        %v955 = vsel %vm623, %v950, -inf
        %956 = vmax.xlane.f32.xlu0 %v955
        %v957 = vpop.xlane.xlu0 %956
        %v958 = vsub.f32 %v950, %v957
        %v959 = vmul.f32 %v958, 1.442695
        %v960 = vpow.pop %v959
        %v961 = vsel %vm623, %v960, 0.0
        %962 = vadd.xlane.f32.xlu0 %v961
        %v963 = vpop.xlane.xlu0 %962
        %v964 = vpack.c.bf16 %v960, %v960
        %s965 = scalar_lea.vmem [#allocation3], 12
        %v966 = vld [vmem:[%s965] sm:$0xf]
        %v968 = vsel %vm623, %v964, 0
        %v971 = vsel %vm638, %v966, 0
        %973 = vmatprep.subr.bf16.mxu0 0
        %974 = vmatpush1.bf16.msra.mxu0 0
        %975 = vmatprep.subr.bf16.mxu0 0
        %976 = vmatpush1.bf16.msra.mxu0 0
        %977 = vmatprep.subr.bf16.mxu0 0
        %978 = vmatpush1.bf16.msra.mxu0 0
        %979 = vmatprep.subr.bf16.mxu0 0
        %980 = vmatpush1.bf16.msra.mxu0 0
        %981 = vmatprep.subr.bf16.mxu0 0
        %982 = vmatpush1.bf16.msra.mxu0 0
        %983 = vmatprep.subr.bf16.mxu0 0
        %984 = vmatpush1.bf16.msra.mxu0 0
        %985 = vmatprep.subr.bf16.mxu0 0
        %986 = vmatpush1.bf16.msra.mxu0 0
        %987 = vmatprep.subr.bf16.mxu0 0
        %988 = vmatpush1.bf16.msra.mxu0 %v971
        %989 = vmatprep.subr.bf16.mxu0 0
        %990 = vmatpush2.bf16.msra.mxu0 0
        %991 = vmatprep.subr.bf16.mxu0 0
        %992 = vmatpush2.bf16.msra.mxu0 0
        %993 = vmatprep.subr.bf16.mxu0 0
        %994 = vmatpush2.bf16.msra.mxu0 0
        %995 = vmatprep.subr.bf16.mxu0 0
        %996 = vmatpush2.bf16.msra.mxu0 0
        %997 = vmatprep.subr.bf16.mxu0 0
        %998 = vmatpush2.bf16.msra.mxu0 0
        %999 = vmatprep.subr.bf16.mxu0 0
        %1000 = vmatpush2.bf16.msra.mxu0 0
        %1001 = vmatprep.subr.bf16.mxu0 0
        %1002 = vmatpush2.bf16.msra.mxu0 0
        %1003 = vmatprep.subr.bf16.mxu0 0
        %1004 = vmatpush2.bf16.msra.mxu0 0
        %1005 = vmatprep.mubr.bf16.mxu0 0
        %1006 = vmatmul.mubr.bf16.gmra.mxu0 %v968
        %v1007 = vpop.f32.mrf.mxu0
        %v1008 = vadd.f32 0.0, %v1007
        %v1009 = vpop.f32.mrf.mxu0
        %v1010 = vpop.f32.mrf.mxu0
        %v1011 = vpop.f32.mrf.mxu0
        %1012 = vdwg.mxu0
        %v1013 = vrcp.pop %v963
        %v1014 = vmul.f32 %v1008, %v1013
        %1016 = vrot.lane.b32.xlu0 %v794, 16
        %v1017 = vpop.permute.xlu0 %1016
        %1020 = vrot.lane.b32.xlu0 %v904, 32
        %v1021 = vpop.permute.xlu0 %1020
        %1024 = vrot.lane.b32.xlu0 %v1014, 48
        %v1025 = vpop.permute.xlu0 %1024
        %v1027 = vsel %vm576, %v683, %v1017
        %v1028 = vsel %vm514, %v1027, %v1021
        %vm1029 = vcmask 392192
        %v1030 = vsel %vm1029, %v1028, %v1025
        %1032 = vrot.lane.b32.xlu0 %v573, 64
        %v1033 = vpop.permute.xlu0 %1032
        %v1035 = vmul.f32 %v1030, %v1033
        %v1036 = vpack.c.bf16 %v1035, %v1035
        %v1037 = vld [vmem:[%s5] sm:$0xf]
        %v1038 = vld [vmem:[%s5 + $0x4] sm:$0xf]
        %v1039 = vld [vmem:[%s5 + $0x8] sm:$0xf]
        %v1040 = vld [vmem:[%s5 + $0xc] sm:$0xf]
        %v1041 = vld [vmem:[%s5 + $0x10] sm:$0xf]
        %v1042 = vld [vmem:[%s5 + $0x14] sm:$0xf]
        %v1043 = vld [vmem:[%s5 + $0x18] sm:$0xf]
        %v1044 = vld [vmem:[%s5 + $0x1c] sm:$0xf]
        %v1053 = vunpack.c.l.b16 %v1037
        %v1054 = vunpack.c.l.b16 %v1038
        %v1055 = vunpack.c.l.b16 %v1039
        %v1056 = vunpack.c.l.b16 %v1040
        %v1057 = vunpack.c.l.b16 %v1041
        %v1058 = vunpack.c.l.b16 %v1042
        %v1059 = vunpack.c.l.b16 %v1043
        %v1060 = vunpack.c.l.b16 %v1044
        %v1061 = vpack.c.b16 %v1054, %v1053
        %v1062 = vpack.c.b16 %v1056, %v1055
        %v1063 = vpack.c.b16 %v1058, %v1057
        %v1064 = vpack.c.b16 %v1060, %v1059
        %vm1069 = vcmask 523264
        %v1071 = vsel %vm1069, %v1036, 0
        %1073 = vmatprep.subr.bf16.mxu0 0
        %1074 = vmatpush1.bf16.msra.mxu0 0
        %1075 = vmatprep.subr.bf16.mxu0 0
        %1076 = vmatpush1.bf16.msra.mxu0 0
        %1077 = vmatprep.subr.bf16.mxu0 0
        %1078 = vmatpush1.bf16.msra.mxu0 0
        %1079 = vmatprep.subr.bf16.mxu0 0
        %1080 = vmatpush1.bf16.msra.mxu0 0
        %1081 = vmatprep.subr.bf16.mxu0 0
        %1082 = vmatpush1.bf16.msra.mxu0 %v1064
        %1083 = vmatprep.subr.bf16.mxu0 0
        %1084 = vmatpush1.bf16.msra.mxu0 %v1063
        %1085 = vmatprep.subr.bf16.mxu0 0
        %1086 = vmatpush1.bf16.msra.mxu0 %v1062
        %1087 = vmatprep.subr.bf16.mxu0 0
        %1088 = vmatpush1.bf16.msra.mxu0 %v1061
        %1089 = vmatprep.subr.bf16.mxu0 0
        %1090 = vmatpush2.bf16.msra.mxu0 0
        %1091 = vmatprep.subr.bf16.mxu0 0
        %1092 = vmatpush2.bf16.msra.mxu0 0
        %1093 = vmatprep.subr.bf16.mxu0 0
        %1094 = vmatpush2.bf16.msra.mxu0 0
        %1095 = vmatprep.subr.bf16.mxu0 0
        %1096 = vmatpush2.bf16.msra.mxu0 0
        %1097 = vmatprep.subr.bf16.mxu0 0
        %1098 = vmatpush2.bf16.msra.mxu0 0
        %1099 = vmatprep.subr.bf16.mxu0 0
        %1100 = vmatpush2.bf16.msra.mxu0 0
        %1101 = vmatprep.subr.bf16.mxu0 0
        %1102 = vmatpush2.bf16.msra.mxu0 0
        %1103 = vmatprep.subr.bf16.mxu0 0
        %1104 = vmatpush2.bf16.msra.mxu0 0
        %1105 = vmatprep.mubr.bf16.mxu0 0
        %1106 = vmatmul.mubr.bf16.gmra.mxu0 %v1071
        %v1107 = vpop.f32.mrf.mxu0
        %v1108 = vadd.f32 0.0, %v1107
        %v1109 = vpop.f32.mrf.mxu0
        %v1110 = vpop.f32.mrf.mxu0
        %v1111 = vpop.f32.mrf.mxu0
        %1112 = vdwg.mxu0
        %v1113 = vadd.f32 %v496, %v1108
        %v1114 = vld [vmem:[%s6] sm:$0x1]
        %v1116 = vlaneseq
        %v1117 = vshrl.u32 %v1116, 7
        %v1118 = vsub.s32 0, %v1117
        %v1119 = vrot.slane %v1114, %v1118
        %v1121 = vadd.f32 %v1113, %v1119
        %v1122 = vsel %vm514, %v1121, 0.0
        %1123 = vadd.xlane.f32.xlu0 %v1122
        %v1124 = vpop.xlane.xlu0 %1123
        %v1125 = vrcp.pop 32.0
        %v1126 = vmul.f32 %v1124, %v1125
        %v1127 = vsub.f32 %v1121, %v1126
        %v1128 = vmul.f32 %v1127, %v1127
        %v1129 = vsel %vm514, %v1128, 0.0
        %1130 = vadd.xlane.f32.xlu0 %v1129
        %v1131 = vpop.xlane.xlu0 %1130
        %v1132 = vmul.f32 %v1131, %v1125
        %v1133 = vadd.f32 %v1132, 1e-05
        %v1134 = vrsqrt.pop %v1133
        %v1135 = vmul.f32 %v1127, %v1134
        %v1136 = vld [vmem:[%s7] sm:$0x1]
        %v1138 = vlaneseq
        %v1139 = vshrl.u32 %v1138, 7
        %v1140 = vsub.s32 0, %v1139
        %v1141 = vrot.slane %v1136, %v1140
        %v1143 = vmul.f32 %v1135, %v1141
        %v1144 = vld [vmem:[%s8] sm:$0x1]
        %v1146 = vlaneseq
        %v1147 = vshrl.u32 %v1146, 7
        %v1148 = vsub.s32 0, %v1147
        %v1149 = vrot.slane %v1144, %v1148
        %v1151 = vadd.f32 %v1143, %v1149
        %1152 = vst.msk [vmem:[%s382] sm:$0xff] %vm514, %v1151
        %s1153 = sand.u32 %s249, 1
        %s1154 = scalar_lea.sflag [#allocation6], %s1153
        %s1155 = sand.u32 %s249, 1
        %s1156 = smul.addr %s1155, 8
        %s1157 = scalar_lea.vmem [#allocation7], %s1156
        // Predicated region
        $region65: #{tpu_custom_call.1} parent=55 // pred_check
          %p1158 = pneg %p259
        $region66: #{tpu_custom_call.1} parent=55 // pred_check_branch
          %1160 = sbr.rel (%p1158) target = $region68
        $region67: #{tpu_custom_call.1} parent=55 // pred_region
          %s1162 = ssub.s32 128, 128
          %1163 = vsyncadd %s1154, %s1162
          %s1164 = sadd.s32 %s31, %s30
          %s1165 = smul.addr %s1164, 128
          %s1166 = scalar_lea.hbm %s9, %s1165
          %s1168 = sshll.u32 %s1157, 4
          %s1169 = int_to_ptr.vmem [resolvable:$true] %s1168
          %1171 = dma.vmem_to_hbm [thread:$0]  %s1169, 128, %s1166, %s1154
        $region68: #{tpu_custom_call.1} parent=55 // pred_fallthru
          _
      $region56: #{tpu_custom_call.1} parent=5 // pred_fallthru
        _
      %p1172 = scmp.le.s32.totalorder 2, %s21
      // Predicated region
      $region69: #{tpu_custom_call.1} parent=5 // pred_check
        %p1173 = pneg %p1172
      $region70: #{tpu_custom_call.1} parent=5 // pred_check_branch
        %1175 = sbr.rel (%p1173) target = $region72
      $region71: #{tpu_custom_call.1} parent=5 // pred_region
        %s1176 = ssub.s32 %s21, 2
        // Predicated region
        $region73: #{tpu_custom_call.1} parent=71 // pred_check
          %p1177 = pneg %p265
        $region74: #{tpu_custom_call.1} parent=71 // pred_check_branch
          %1179 = sbr.rel (%p1177) target = $region76
        $region75: #{tpu_custom_call.1} parent=71 // pred_region
          %s1180 = sand.u32 %s250, 1
          %s1181 = scalar_lea.sflag [#allocation6], %s1180
          %s1182 = sand.u32 %s250, 1
          %s1183 = smul.addr %s1182, 8
          %s1184 = scalar_lea.vmem [#allocation7], %s1183
          %1185 = dma.done %s1181, 128
        $region76: #{tpu_custom_call.1} parent=71 // pred_fallthru
          _
      $region72: #{tpu_custom_call.1} parent=5 // pred_fallthru
        _
    $region6: #{tpu_custom_call.1} parent=1 // loop_footer
      %s25 = sadd.s32 1, %s21
    $region7: #{tpu_custom_call.1} parent=1 // loop_footer_branch
      %20 = sbr.rel target = $region3
    $region8: #{tpu_custom_call.1} parent=1 // loop_exit
      _
    %1186 = vsyncpa [#allocation5], 1
    %s1187 = scalar_lea.sflag [#allocation5], 1
    %1188 = vsyncpa %s1187, 1
    %1189 = vsyncpa [#allocation6], 1
    %s1190 = scalar_lea.sflag [#allocation6], 1
    %1191 = vsyncpa %s1190, 1

</llo_original>
